<compile_context>
chip_gen: v5e
topology: v5e:2x2
jax: 0.10.0
libtpu: 0.0.40
codegen_flags: <defaults>
</compile_context>

<pallas_src>
import jax
import jax.numpy as jnp
from jax import lax
from jax.experimental import pallas as pl
from jax.experimental.pallas import tpu as pltpu

EPS = 1e-5  # nn.GroupNorm default


def _round_up(a, b):
    return (a + b - 1) // b * b


def _gn3(y):
    """GroupNorm(num_groups=C, num_channels=C, affine=False) on y: (NB, S, C) float32.

    Per-(sample, channel) normalization over the spatial axis S, single-pass statistics
    (var = E[x^2] - E[x]^2), biased variance and eps inside the sqrt as in PyTorch."""
    m = jnp.mean(y, axis=1, keepdims=True)
    ms = jnp.mean(y * y, axis=1, keepdims=True)
    var = jnp.maximum(ms - m * m, 0.0)
    return (y - m) * lax.rsqrt(var + EPS)


# conv1 tap (kh, kw) -> index of the pre-shifted parity-field variant it reads.
# Variants (built in the wrapper): 0:(ph0,pw0,woff0) 1:(ph0,pw0,woff1) 2:(ph0,pw1,woff0)
#                                  3:(ph1,pw0,woff0) 4:(ph1,pw0,woff1) 5:(ph1,pw1,woff0)
_TAP_VARIANT = {(0, 0): 0, (0, 1): 2, (0, 2): 1,
                (1, 0): 3, (1, 1): 5, (1, 2): 4,
                (2, 0): 0, (2, 1): 2, (2, 2): 1}


def _make_kernel(NB, Ho, Wo, P, Cin, Hp, W2p, chan_major, m_out):
    S = Ho * Wo
    M = NB * S

    def kernel(x_ref, w1_ref, w2_ref, wds_ref, out_ref, y1pad_ref, acc_ref):
        # Static shapes:
        #   x_ref    : (NB, 6*Hp, Wo, Cin) bf16 -- 6 pre-shifted parity fields of pad(x)
        #   w1_ref   : (9, Cin, P)         bf16 -- conv1 taps
        #   w2_ref   : (9, P, P)           bf16 -- conv2 taps
        #   wds_ref  : (Cin, P)            bf16 -- 1x1 stride-2 downsample
        #   out_ref  : (P, m_out) or (m_out, P) f32
        #   y1pad_ref: (NB, Ho+2, W2p, P)  f32  -- zero-halo staging of relu(GN(conv1))
        #   acc_ref  : (M, P)              f32  -- shared conv1/conv2 accumulator

        # ---- conv1 (3x3, stride 2): 9 accumulated MXU matmuls over parity-field views.
        # Every slice is along an outer dim of a bf16 block already in VMEM (no relayout,
        # no per-tap casts).  The 1x1/s2 downsample reads exactly the centre tap, so it is
        # one extra P-wide matmul instead of zero-padded weight columns on all 9 taps.
        ds_raw = None
        for kh in range(3):
            for kw in range(3):
                v = _TAP_VARIANT[(kh, kw)]
                h0 = v * Hp + kh // 2
                tap = x_ref[:, h0:h0 + Ho, :, :].reshape(M, Cin)       # bf16
                d = jnp.dot(tap, w1_ref[kh * 3 + kw],
                            preferred_element_type=jnp.float32)
                if kh == 0 and kw == 0:
                    acc_ref[...] = d           # init with the first tap (no zeros+add)
                else:
                    acc_ref[...] += d
                if kh == 1 and kw == 1:
                    ds_raw = jnp.dot(tap, wds_ref[...],
                                     preferred_element_type=jnp.float32)

        ident = _gn3(ds_raw.reshape(NB, S, P)).reshape(M, P)            # GN(downsample(x))
        y1 = jnp.maximum(_gn3(acc_ref[...].reshape(NB, S, P)), 0.0)     # relu(GN(conv1(x)))

        # ---- stage y1 as a zero-padded image in VMEM for conv2's shifted views.
        # Only the 1-px halo ring is zeroed (every step, so steps stay independent and the
        # grid axis can be "parallel"); the interior is fully overwritten each step.
        zrow = jnp.zeros((NB, 1, W2p, P), jnp.float32)
        y1pad_ref[:, 0:1, :, :] = zrow
        y1pad_ref[:, Ho + 1:Ho + 2, :, :] = zrow
        y1pad_ref[:, 1:Ho + 1, 0:1, :] = jnp.zeros((NB, Ho, 1, P), jnp.float32)
        y1pad_ref[:, 1:Ho + 1, Wo + 1:Wo + 2, :] = jnp.zeros((NB, Ho, 1, P), jnp.float32)
        y1pad_ref[:, 1:Ho + 1, 1:Wo + 1, :] = y1.reshape(NB, Ho, Wo, P)

        # ---- conv2 (3x3, stride 1): 9 accumulated matmuls over shifted VMEM views;
        # the conv1 accumulator ref is dead here and is reused.
        for kh in range(3):
            for kw in range(3):
                tap = y1pad_ref[:, kh:kh + Ho, kw:kw + Wo, :].reshape(M, P)
                d = jnp.dot(tap.astype(jnp.bfloat16), w2_ref[kh * 3 + kw],
                            preferred_element_type=jnp.float32)
                if kh == 0 and kw == 0:
                    acc_ref[...] = d
                else:
                    acc_ref[...] += d

        out = jnp.maximum(_gn3(acc_ref[...].reshape(NB, S, P)).reshape(M, P) + ident, 0.0)

        if chan_major:
            # P < 128: emit a channels-major lane-dense (P, m_out) slab.  The transpose is
            # a tiny (P,P)-identity contraction (eye @ out^T, the q@k^T pattern); its cost
            # P*P*M is ~M/P times cheaper than the old (M,M) identity matmul.
            eye = (lax.broadcasted_iota(jnp.int32, (P, P), 0)
                   == lax.broadcasted_iota(jnp.int32, (P, P), 1)).astype(jnp.float32)
            t = lax.dot_general(eye, out, (((1,), (1,)), ((), ())),
                                preferred_element_type=jnp.float32)
            if m_out != M:
                t = jnp.concatenate(
                    [t, jnp.zeros((P, m_out - M), jnp.float32)], axis=1)
            out_ref[...] = t
        else:
            # P >= 128: (M, P) is already lane-dense -> no transpose at all.
            if m_out != M:
                out = jnp.concatenate(
                    [out, jnp.zeros((m_out - M, P), jnp.float32)], axis=0)
            out_ref[...] = out

    return kernel


def _vmem_capacity_bytes():
    try:
        info = pltpu.get_tpu_info()
        for attr in ("vmem_capacity_bytes", "vmem_bytes", "vmem_size_bytes"):
            v = getattr(info, attr, None)
            if v:
                return int(v)
    except Exception:
        pass
    return 64 * 1024 * 1024  # conservative (v7x per-TensorCore)


def basic_block_simple_ds(x_nchw, w1_hwio, w2_hwio, wds_hwio):
    """x_nchw: (N, Cin, H, W); weights in HWIO layout:
       w1 (3,3,Cin,P), w2 (3,3,P,P), wds (1,1,Cin,P).  Returns NCHW (N, P, H//2, W//2)."""
    x = jnp.transpose(x_nchw, (0, 2, 3, 1)).astype(jnp.float32)   # NCHW -> NHWC
    N, H, W, Cin = x.shape
    assert H % 2 == 0 and W % 2 == 0, "even spatial dims expected for the stride-2 block"
    P = int(w1_hwio.shape[-1])
    Ho, Wo = H // 2, W // 2
    S = Ho * Wo
    Hp = Ho + 1
    W2p = _round_up(Wo + 2, 8)          # sublane-aligned staging-buffer width
    chan_major = P < 128                # emit (P, M) slab for small P, (M, P) otherwise

    # Six pre-shifted parity-field variants of the zero-padded input, stored in bf16.
    # Every tap of the stride-2 3x3 conv (and the 1x1/s2 downsample) is then a slice of
    # one variant along the OUTER row axis only -> cheap, alignment-safe kernel reads,
    # ~1.5x of x in element count but bf16, so ~0.75x of x in HBM bytes (vs 9x im2col).
    xp = jnp.pad(x, ((0, 0), (1, 1), (1, 1), (0, 0)))
    f00 = xp[:, 0::2, 0::2, :]
    f01 = xp[:, 0::2, 1::2, :]
    f10 = xp[:, 1::2, 0::2, :]
    f11 = xp[:, 1::2, 1::2, :]
    variants = [
        f00[:, :, 0:Wo, :],        # v0: ph0 pw0 woff0
        f00[:, :, 1:Wo + 1, :],    # v1: ph0 pw0 woff1
        f01[:, :, 0:Wo, :],        # v2: ph0 pw1 woff0
        f10[:, :, 0:Wo, :],        # v3: ph1 pw0 woff0
        f10[:, :, 1:Wo + 1, :],    # v4: ph1 pw0 woff1
        f11[:, :, 0:Wo, :],        # v5: ph1 pw1 woff0
    ]
    x_par = jnp.concatenate(variants, axis=1).astype(jnp.bfloat16)  # (N, 6*Hp, Wo, Cin)

    w1 = w1_hwio.reshape(9, Cin, P).astype(jnp.bfloat16)
    w2 = w2_hwio.reshape(9, P, P).astype(jnp.bfloat16)
    wds = wds_hwio.reshape(Cin, P).astype(jnp.bfloat16)

    # Per-generation VMEM budget (v5e/v6e: 128 MiB physical -> ~96 MiB; v7x: 64 -> 48).
    vmem_limit = min(_vmem_capacity_bytes() * 3 // 4, 100 * 1024 * 1024)
    budget = vmem_limit * 3 // 5        # headroom for double-buffering slack / temporaries

    def _est(nb):
        m = nb * S
        m_pad = _round_up(m, 128) if chan_major else _round_up(m, 8)
        in_blk = nb * 6 * Hp * Wo * Cin * 2                 # bf16 input block
        w_b = (9 * Cin * P + 9 * P * P + Cin * P) * 2       # bf16 weights
        y1pad = nb * (Ho + 2) * W2p * P * 4                 # f32 staging scratch
        acc = m * P * 4                                     # f32 accumulator scratch
        ssa = 5 * m * P * 4                                 # GN/ident/out live values
        out_blk = (P * m_pad if chan_major else m_pad * P) * 4
        return 2 * (in_blk + w_b + out_blk) + y1pad + acc + ssa

    # NB = samples per grid step: largest divisor of N that fits the VMEM budget, preferring
    # a grid of length >= 2 (v7x megacore) and an unpadded lane-dense output (NB*S % 128 == 0).
    divisors = [d for d in range(1, N + 1) if N % d == 0]
    feasible = [d for d in divisors if _est(d) <= budget] or [1]
    NB = max(feasible, key=lambda d: ((N // d) >= 2, (d * S) % 128 == 0, d))
    G = N // NB
    grid = (G,)
    M = NB * S

    if chan_major:
        m_out = _round_up(M, 128)
        out_spec = pl.BlockSpec((P, m_out), lambda n: (0, n))
        out_shape = jax.ShapeDtypeStruct((P, G * m_out), jnp.float32)
    else:
        m_out = _round_up(M, 8)
        out_spec = pl.BlockSpec((m_out, P), lambda n: (n, 0))
        out_shape = jax.ShapeDtypeStruct((G * m_out, P), jnp.float32)

    kernel = _make_kernel(NB, Ho, Wo, P, Cin, Hp, W2p, chan_major, m_out)

    out_t = pl.pallas_call(
        kernel,
        grid=grid,
        in_specs=[
            pl.BlockSpec((NB, 6 * Hp, Wo, Cin), lambda n: (n, 0, 0, 0)),
            pl.BlockSpec((9, Cin, P), lambda n: (0, 0, 0)),
            pl.BlockSpec((9, P, P), lambda n: (0, 0, 0)),
            pl.BlockSpec((Cin, P), lambda n: (0, 0)),
        ],
        out_specs=out_spec,
        out_shape=out_shape,
        scratch_shapes=[
            pltpu.VMEM((NB, Ho + 2, W2p, P), jnp.float32),   # y1 staging (zero halo)
            pltpu.VMEM((M, P), jnp.float32),                 # shared conv accumulator
        ],
        compiler_params=pltpu.CompilerParams(
            dimension_semantics=("parallel",),
            vmem_limit_bytes=int(vmem_limit),
        ),
    )(x_par, w1, w2, wds)

    # Undo the (padded) lane-dense packing -> NCHW with a tiny reshape + permute.
    if chan_major:
        out = out_t.reshape(P, G, m_out)[:, :, :M].reshape(P, G, NB, Ho, Wo)
        out = jnp.transpose(out, (1, 2, 0, 3, 4)).reshape(N, P, Ho, Wo)
    else:
        out = out_t.reshape(G, m_out, P)[:, :M].reshape(G, NB, Ho, Wo, P)
        out = jnp.transpose(out, (0, 1, 4, 2, 3)).reshape(N, P, Ho, Wo)
    return out


# -------------------- pure-JAX reference (for verification) --------------------
def _gn_nhwc(x):
    m = jnp.mean(x, axis=(1, 2), keepdims=True)
    v = jnp.mean(jnp.square(x - m), axis=(1, 2), keepdims=True)
    return (x - m) * lax.rsqrt(v + EPS)


def _reference_nhwc(x, w1_hwio, w2_hwio, wds_hwio):
    dn = ('NHWC', 'HWIO', 'NHWC')
    id_conv = lax.conv_general_dilated(x, wds_hwio, (2, 2), 'VALID', dimension_numbers=dn)
    id_ds = _gn_nhwc(id_conv)
    out = lax.conv_general_dilated(x, w1_hwio, (2, 2), ((1, 1), (1, 1)), dimension_numbers=dn)
    out = jnp.maximum(_gn_nhwc(out), 0.0)
    out = lax.conv_general_dilated(out, w2_hwio, (1, 1), ((1, 1), (1, 1)), dimension_numbers=dn)
    out = _gn_nhwc(out)
    return jnp.maximum(out + id_ds, 0.0)


if __name__ == "__main__":
    key = jax.random.PRNGKey(0)
    N, Cin, H, W = 2, 4, 16, 16   # small NCHW input, matching the module's conventions
    P = 8                         # planes

    k1, k2, k3, k4 = jax.random.split(key, 4)
    x_nchw = jax.random.normal(k1, (N, Cin, H, W), jnp.float32)
    # Deterministic synthetic parameters (bias=False convs, GroupNorm affine=False -> no params).
    w1 = jax.random.normal(k2, (3, 3, Cin, P), jnp.float32) * 0.2    # conv1 3x3 s2
    w2 = jax.random.normal(k3, (3, 3, P, P), jnp.float32) * 0.2      # conv2 3x3 s1
    wds = jax.random.normal(k4, (1, 1, Cin, P), jnp.float32) * 0.2   # downsample 1x1 s2

    out = jax.block_until_ready(basic_block_simple_ds(x_nchw, w1, w2, wds))

    # verify against the pure-JAX f32 reference (kernel uses bf16 MXU operands with f32
    # accumulation and f32 GN/residual, hence the relaxed tolerance).
    x_nhwc = jnp.transpose(x_nchw, (0, 2, 3, 1))
    ref = jnp.transpose(_reference_nhwc(x_nhwc, w1, w2, wds), (0, 3, 1, 2))
    assert out.shape == (N, P, H // 2, W // 2), out.shape
    max_err = float(jnp.max(jnp.abs(out - ref)))
    assert jnp.allclose(out, ref, atol=6e-2, rtol=6e-2), max_err

    print("KERNEL_OK")
</pallas_src>

<mosaic_0001>
module attributes {stable_mosaic.version = 11 : i64} {
  func.func @kernel(%arg0: i32, %arg1: memref<1x54x8x4xbf16, #tpu.memory_space<vmem>>, %arg2: memref<9x4x8xbf16, #tpu.memory_space<vmem>>, %arg3: memref<9x8x8xbf16, #tpu.memory_space<vmem>>, %arg4: memref<4x8xbf16, #tpu.memory_space<vmem>>, %arg5: memref<8x128xf32, #tpu.memory_space<vmem>>, %arg6: memref<1x10x16x8xf32, #tpu.memory_space<vmem>>, %arg7: memref<64x8xf32, #tpu.memory_space<vmem>>) attributes {dimension_semantics = [#tpu.dimension_semantics<parallel>], iteration_bounds = array<i64: 2>, scalar_prefetch = 0 : i64, scratch_operands = 2 : i64, tpu.core_type = #tpu.core_type<tc>, window_params = [{transform_indices = @transform_0, window_bounds = array<i64: 1, 54, 8, 4>}, {pipeline_mode = #tpu.pipeline_mode<synchronous>, transform_indices = @transform_1, window_bounds = array<i64: 9, 4, 8>}, {pipeline_mode = #tpu.pipeline_mode<synchronous>, transform_indices = @transform_2, window_bounds = array<i64: 9, 8, 8>}, {pipeline_mode = #tpu.pipeline_mode<synchronous>, transform_indices = @transform_3, window_bounds = array<i64: 4, 8>}, {transform_indices = @transform_4, window_bounds = array<i64: 8, 128>}]} {
    %c0 = arith.constant 0 : index
    %c0_0 = arith.constant 0 : index
    %c0_1 = arith.constant 0 : index
    %c0_2 = arith.constant 0 : index
    %0 = vector.load %arg1[%c0, %c0_0, %c0_1, %c0_2] : memref<1x54x8x4xbf16, #tpu.memory_space<vmem>>, vector<1x8x8x4xbf16>
    %1 = vector.shape_cast %0 : vector<1x8x8x4xbf16> to vector<64x4xbf16>
    %c0_3 = arith.constant 0 : index
    %c0_4 = arith.constant 0 : index
    %c0_5 = arith.constant 0 : index
    %2 = vector.load %arg2[%c0_3, %c0_4, %c0_5] : memref<9x4x8xbf16, #tpu.memory_space<vmem>>, vector<1x4x8xbf16>
    %3 = vector.shape_cast %2 : vector<1x4x8xbf16> to vector<4x8xbf16>
    %cst = arith.constant dense<0.000000e+00> : vector<64x8xf32>
    %4 = tpu.matmul %1, %3, %cst {dimension_numbers = #tpu.dot_dimension_numbers<[1], [0], [0], [1], [0, 0, 1, 1], [], []>} : vector<64x4xbf16>, vector<4x8xbf16>, vector<64x8xf32> -> vector<64x8xf32>
    %c0_6 = arith.constant 0 : index
    %c0_7 = arith.constant 0 : index
    %5 = vector.load %arg7[%c0_6, %c0_7] : memref<64x8xf32, #tpu.memory_space<vmem>>, vector<64x8xf32>
    tpu.vector_store %arg7[%c0_6, %c0_7], %4 {strides = array<i32>} : memref<64x8xf32, #tpu.memory_space<vmem>>, vector<64x8xf32>,
    %c0_8 = arith.constant 0 : index
    %c18 = arith.constant 18 : index
    %c0_9 = arith.constant 0 : index
    %c0_10 = arith.constant 0 : index
    %6 = vector.load %arg1[%c0_8, %c18, %c0_9, %c0_10] : memref<1x54x8x4xbf16, #tpu.memory_space<vmem>>, vector<1x8x8x4xbf16>
    %7 = vector.shape_cast %6 : vector<1x8x8x4xbf16> to vector<64x4xbf16>
    %c1 = arith.constant 1 : index
    %c0_11 = arith.constant 0 : index
    %c0_12 = arith.constant 0 : index
    %8 = vector.load %arg2[%c1, %c0_11, %c0_12] : memref<9x4x8xbf16, #tpu.memory_space<vmem>>, vector<1x4x8xbf16>
    %9 = vector.shape_cast %8 : vector<1x4x8xbf16> to vector<4x8xbf16>
    %cst_13 = arith.constant dense<0.000000e+00> : vector<64x8xf32>
    %10 = tpu.matmul %7, %9, %cst_13 {dimension_numbers = #tpu.dot_dimension_numbers<[1], [0], [0], [1], [0, 0, 1, 1], [], []>} : vector<64x4xbf16>, vector<4x8xbf16>, vector<64x8xf32> -> vector<64x8xf32>
    %c0_14 = arith.constant 0 : index
    %c0_15 = arith.constant 0 : index
    %11 = vector.load %arg7[%c0_14, %c0_15] : memref<64x8xf32, #tpu.memory_space<vmem>>, vector<64x8xf32>
    %12 = arith.addf %11, %10 : vector<64x8xf32>
    %c0_16 = arith.constant 0 : index
    %c0_17 = arith.constant 0 : index
    %13 = vector.load %arg7[%c0_16, %c0_17] : memref<64x8xf32, #tpu.memory_space<vmem>>, vector<64x8xf32>
    tpu.vector_store %arg7[%c0_16, %c0_17], %12 {strides = array<i32>} : memref<64x8xf32, #tpu.memory_space<vmem>>, vector<64x8xf32>,
    %c0_18 = arith.constant 0 : index
    %c9 = arith.constant 9 : index
    %c0_19 = arith.constant 0 : index
    %c0_20 = arith.constant 0 : index
    %14 = vector.load %arg1[%c0_18, %c9, %c0_19, %c0_20] : memref<1x54x8x4xbf16, #tpu.memory_space<vmem>>, vector<1x8x8x4xbf16>
    %15 = vector.shape_cast %14 : vector<1x8x8x4xbf16> to vector<64x4xbf16>
    %c2 = arith.constant 2 : index
    %c0_21 = arith.constant 0 : index
    %c0_22 = arith.constant 0 : index
    %16 = vector.load %arg2[%c2, %c0_21, %c0_22] : memref<9x4x8xbf16, #tpu.memory_space<vmem>>, vector<1x4x8xbf16>
    %17 = vector.shape_cast %16 : vector<1x4x8xbf16> to vector<4x8xbf16>
    %cst_23 = arith.constant dense<0.000000e+00> : vector<64x8xf32>
    %18 = tpu.matmul %15, %17, %cst_23 {dimension_numbers = #tpu.dot_dimension_numbers<[1], [0], [0], [1], [0, 0, 1, 1], [], []>} : vector<64x4xbf16>, vector<4x8xbf16>, vector<64x8xf32> -> vector<64x8xf32>
    %c0_24 = arith.constant 0 : index
    %c0_25 = arith.constant 0 : index
    %19 = vector.load %arg7[%c0_24, %c0_25] : memref<64x8xf32, #tpu.memory_space<vmem>>, vector<64x8xf32>
    %20 = arith.addf %19, %18 : vector<64x8xf32>
    %c0_26 = arith.constant 0 : index
    %c0_27 = arith.constant 0 : index
    %21 = vector.load %arg7[%c0_26, %c0_27] : memref<64x8xf32, #tpu.memory_space<vmem>>, vector<64x8xf32>
    tpu.vector_store %arg7[%c0_26, %c0_27], %20 {strides = array<i32>} : memref<64x8xf32, #tpu.memory_space<vmem>>, vector<64x8xf32>,
    %c0_28 = arith.constant 0 : index
    %c27 = arith.constant 27 : index
    %c0_29 = arith.constant 0 : index
    %c0_30 = arith.constant 0 : index
    %22 = vector.load %arg1[%c0_28, %c27, %c0_29, %c0_30] : memref<1x54x8x4xbf16, #tpu.memory_space<vmem>>, vector<1x8x8x4xbf16>
    %23 = vector.shape_cast %22 : vector<1x8x8x4xbf16> to vector<64x4xbf16>
    %c3 = arith.constant 3 : index
    %c0_31 = arith.constant 0 : index
    %c0_32 = arith.constant 0 : index
    %24 = vector.load %arg2[%c3, %c0_31, %c0_32] : memref<9x4x8xbf16, #tpu.memory_space<vmem>>, vector<1x4x8xbf16>
    %25 = vector.shape_cast %24 : vector<1x4x8xbf16> to vector<4x8xbf16>
    %cst_33 = arith.constant dense<0.000000e+00> : vector<64x8xf32>
    %26 = tpu.matmul %23, %25, %cst_33 {dimension_numbers = #tpu.dot_dimension_numbers<[1], [0], [0], [1], [0, 0, 1, 1], [], []>} : vector<64x4xbf16>, vector<4x8xbf16>, vector<64x8xf32> -> vector<64x8xf32>
    %c0_34 = arith.constant 0 : index
    %c0_35 = arith.constant 0 : index
    %27 = vector.load %arg7[%c0_34, %c0_35] : memref<64x8xf32, #tpu.memory_space<vmem>>, vector<64x8xf32>
    %28 = arith.addf %27, %26 : vector<64x8xf32>
    %c0_36 = arith.constant 0 : index
    %c0_37 = arith.constant 0 : index
    %29 = vector.load %arg7[%c0_36, %c0_37] : memref<64x8xf32, #tpu.memory_space<vmem>>, vector<64x8xf32>
    tpu.vector_store %arg7[%c0_36, %c0_37], %28 {strides = array<i32>} : memref<64x8xf32, #tpu.memory_space<vmem>>, vector<64x8xf32>,
    %c0_38 = arith.constant 0 : index
    %c45 = arith.constant 45 : index
    %c0_39 = arith.constant 0 : index
    %c0_40 = arith.constant 0 : index
    %30 = vector.load %arg1[%c0_38, %c45, %c0_39, %c0_40] : memref<1x54x8x4xbf16, #tpu.memory_space<vmem>>, vector<1x8x8x4xbf16>
    %31 = vector.shape_cast %30 : vector<1x8x8x4xbf16> to vector<64x4xbf16>
    %c4 = arith.constant 4 : index
    %c0_41 = arith.constant 0 : index
    %c0_42 = arith.constant 0 : index
    %32 = vector.load %arg2[%c4, %c0_41, %c0_42] : memref<9x4x8xbf16, #tpu.memory_space<vmem>>, vector<1x4x8xbf16>
    %33 = vector.shape_cast %32 : vector<1x4x8xbf16> to vector<4x8xbf16>
    %cst_43 = arith.constant dense<0.000000e+00> : vector<64x8xf32>
    %34 = tpu.matmul %31, %33, %cst_43 {dimension_numbers = #tpu.dot_dimension_numbers<[1], [0], [0], [1], [0, 0, 1, 1], [], []>} : vector<64x4xbf16>, vector<4x8xbf16>, vector<64x8xf32> -> vector<64x8xf32>
    %c0_44 = arith.constant 0 : index
    %c0_45 = arith.constant 0 : index
    %35 = vector.load %arg7[%c0_44, %c0_45] : memref<64x8xf32, #tpu.memory_space<vmem>>, vector<64x8xf32>
    %36 = arith.addf %35, %34 : vector<64x8xf32>
    %c0_46 = arith.constant 0 : index
    %c0_47 = arith.constant 0 : index
    %37 = vector.load %arg7[%c0_46, %c0_47] : memref<64x8xf32, #tpu.memory_space<vmem>>, vector<64x8xf32>
    tpu.vector_store %arg7[%c0_46, %c0_47], %36 {strides = array<i32>} : memref<64x8xf32, #tpu.memory_space<vmem>>, vector<64x8xf32>,
    %c0_48 = arith.constant 0 : index
    %c0_49 = arith.constant 0 : index
    %38 = vector.load %arg4[%c0_48, %c0_49] : memref<4x8xbf16, #tpu.memory_space<vmem>>, vector<4x8xbf16>
    %cst_50 = arith.constant dense<0.000000e+00> : vector<64x8xf32>
    %39 = tpu.matmul %31, %38, %cst_50 {dimension_numbers = #tpu.dot_dimension_numbers<[1], [0], [0], [1], [0, 0, 1, 1], [], []>} : vector<64x4xbf16>, vector<4x8xbf16>, vector<64x8xf32> -> vector<64x8xf32>
    %c0_51 = arith.constant 0 : index
    %c36 = arith.constant 36 : index
    %c0_52 = arith.constant 0 : index
    %c0_53 = arith.constant 0 : index
    %40 = vector.load %arg1[%c0_51, %c36, %c0_52, %c0_53] : memref<1x54x8x4xbf16, #tpu.memory_space<vmem>>, vector<1x8x8x4xbf16>
    %41 = vector.shape_cast %40 : vector<1x8x8x4xbf16> to vector<64x4xbf16>
    %c5 = arith.constant 5 : index
    %c0_54 = arith.constant 0 : index
    %c0_55 = arith.constant 0 : index
    %42 = vector.load %arg2[%c5, %c0_54, %c0_55] : memref<9x4x8xbf16, #tpu.memory_space<vmem>>, vector<1x4x8xbf16>
    %43 = vector.shape_cast %42 : vector<1x4x8xbf16> to vector<4x8xbf16>
    %cst_56 = arith.constant dense<0.000000e+00> : vector<64x8xf32>
    %44 = tpu.matmul %41, %43, %cst_56 {dimension_numbers = #tpu.dot_dimension_numbers<[1], [0], [0], [1], [0, 0, 1, 1], [], []>} : vector<64x4xbf16>, vector<4x8xbf16>, vector<64x8xf32> -> vector<64x8xf32>
    %c0_57 = arith.constant 0 : index
    %c0_58 = arith.constant 0 : index
    %45 = vector.load %arg7[%c0_57, %c0_58] : memref<64x8xf32, #tpu.memory_space<vmem>>, vector<64x8xf32>
    %46 = arith.addf %45, %44 : vector<64x8xf32>
    %c0_59 = arith.constant 0 : index
    %c0_60 = arith.constant 0 : index
    %47 = vector.load %arg7[%c0_59, %c0_60] : memref<64x8xf32, #tpu.memory_space<vmem>>, vector<64x8xf32>
    tpu.vector_store %arg7[%c0_59, %c0_60], %46 {strides = array<i32>} : memref<64x8xf32, #tpu.memory_space<vmem>>, vector<64x8xf32>,
    %c0_61 = arith.constant 0 : index
    %c1_62 = arith.constant 1 : index
    %c0_63 = arith.constant 0 : index
    %c0_64 = arith.constant 0 : index
    %48 = vector.load %arg1[%c0_61, %c1_62, %c0_63, %c0_64] : memref<1x54x8x4xbf16, #tpu.memory_space<vmem>>, vector<1x8x8x4xbf16>
    %49 = vector.shape_cast %48 : vector<1x8x8x4xbf16> to vector<64x4xbf16>
    %c6 = arith.constant 6 : index
    %c0_65 = arith.constant 0 : index
    %c0_66 = arith.constant 0 : index
    %50 = vector.load %arg2[%c6, %c0_65, %c0_66] : memref<9x4x8xbf16, #tpu.memory_space<vmem>>, vector<1x4x8xbf16>
    %51 = vector.shape_cast %50 : vector<1x4x8xbf16> to vector<4x8xbf16>
    %cst_67 = arith.constant dense<0.000000e+00> : vector<64x8xf32>
    %52 = tpu.matmul %49, %51, %cst_67 {dimension_numbers = #tpu.dot_dimension_numbers<[1], [0], [0], [1], [0, 0, 1, 1], [], []>} : vector<64x4xbf16>, vector<4x8xbf16>, vector<64x8xf32> -> vector<64x8xf32>
    %c0_68 = arith.constant 0 : index
    %c0_69 = arith.constant 0 : index
    %53 = vector.load %arg7[%c0_68, %c0_69] : memref<64x8xf32, #tpu.memory_space<vmem>>, vector<64x8xf32>
    %54 = arith.addf %53, %52 : vector<64x8xf32>
    %c0_70 = arith.constant 0 : index
    %c0_71 = arith.constant 0 : index
    %55 = vector.load %arg7[%c0_70, %c0_71] : memref<64x8xf32, #tpu.memory_space<vmem>>, vector<64x8xf32>
    tpu.vector_store %arg7[%c0_70, %c0_71], %54 {strides = array<i32>} : memref<64x8xf32, #tpu.memory_space<vmem>>, vector<64x8xf32>,
    %c0_72 = arith.constant 0 : index
    %c19 = arith.constant 19 : index
    %c0_73 = arith.constant 0 : index
    %c0_74 = arith.constant 0 : index
    %56 = vector.load %arg1[%c0_72, %c19, %c0_73, %c0_74] : memref<1x54x8x4xbf16, #tpu.memory_space<vmem>>, vector<1x8x8x4xbf16>
    %57 = vector.shape_cast %56 : vector<1x8x8x4xbf16> to vector<64x4xbf16>
    %c7 = arith.constant 7 : index
    %c0_75 = arith.constant 0 : index
    %c0_76 = arith.constant 0 : index
    %58 = vector.load %arg2[%c7, %c0_75, %c0_76] : memref<9x4x8xbf16, #tpu.memory_space<vmem>>, vector<1x4x8xbf16>
    %59 = vector.shape_cast %58 : vector<1x4x8xbf16> to vector<4x8xbf16>
    %cst_77 = arith.constant dense<0.000000e+00> : vector<64x8xf32>
    %60 = tpu.matmul %57, %59, %cst_77 {dimension_numbers = #tpu.dot_dimension_numbers<[1], [0], [0], [1], [0, 0, 1, 1], [], []>} : vector<64x4xbf16>, vector<4x8xbf16>, vector<64x8xf32> -> vector<64x8xf32>
    %c0_78 = arith.constant 0 : index
    %c0_79 = arith.constant 0 : index
    %61 = vector.load %arg7[%c0_78, %c0_79] : memref<64x8xf32, #tpu.memory_space<vmem>>, vector<64x8xf32>
    %62 = arith.addf %61, %60 : vector<64x8xf32>
    %c0_80 = arith.constant 0 : index
    %c0_81 = arith.constant 0 : index
    %63 = vector.load %arg7[%c0_80, %c0_81] : memref<64x8xf32, #tpu.memory_space<vmem>>, vector<64x8xf32>
    tpu.vector_store %arg7[%c0_80, %c0_81], %62 {strides = array<i32>} : memref<64x8xf32, #tpu.memory_space<vmem>>, vector<64x8xf32>,
    %c0_82 = arith.constant 0 : index
    %c10 = arith.constant 10 : index
    %c0_83 = arith.constant 0 : index
    %c0_84 = arith.constant 0 : index
    %64 = vector.load %arg1[%c0_82, %c10, %c0_83, %c0_84] : memref<1x54x8x4xbf16, #tpu.memory_space<vmem>>, vector<1x8x8x4xbf16>
    %65 = vector.shape_cast %64 : vector<1x8x8x4xbf16> to vector<64x4xbf16>
    %c8 = arith.constant 8 : index
    %c0_85 = arith.constant 0 : index
    %c0_86 = arith.constant 0 : index
    %66 = vector.load %arg2[%c8, %c0_85, %c0_86] : memref<9x4x8xbf16, #tpu.memory_space<vmem>>, vector<1x4x8xbf16>
    %67 = vector.shape_cast %66 : vector<1x4x8xbf16> to vector<4x8xbf16>
    %cst_87 = arith.constant dense<0.000000e+00> : vector<64x8xf32>
    %68 = tpu.matmul %65, %67, %cst_87 {dimension_numbers = #tpu.dot_dimension_numbers<[1], [0], [0], [1], [0, 0, 1, 1], [], []>} : vector<64x4xbf16>, vector<4x8xbf16>, vector<64x8xf32> -> vector<64x8xf32>
    %c0_88 = arith.constant 0 : index
    %c0_89 = arith.constant 0 : index
    %69 = vector.load %arg7[%c0_88, %c0_89] : memref<64x8xf32, #tpu.memory_space<vmem>>, vector<64x8xf32>
    %70 = arith.addf %69, %68 : vector<64x8xf32>
    %c0_90 = arith.constant 0 : index
    %c0_91 = arith.constant 0 : index
    %71 = vector.load %arg7[%c0_90, %c0_91] : memref<64x8xf32, #tpu.memory_space<vmem>>, vector<64x8xf32>
    tpu.vector_store %arg7[%c0_90, %c0_91], %70 {strides = array<i32>} : memref<64x8xf32, #tpu.memory_space<vmem>>, vector<64x8xf32>,
    %72 = vector.shape_cast %39 : vector<64x8xf32> to vector<1x64x8xf32>
    %cst_92 = arith.constant dense<0.000000e+00> : vector<1x8xf32>
    %73 = vector.multi_reduction <add>, %72, %cst_92 [1] : vector<1x64x8xf32> to vector<1x8xf32>
    %74 = vector.shape_cast %73 : vector<1x8xf32> to vector<1x1x8xf32>
    %cst_93 = arith.constant 6.400000e+01 : f32
    %75 = vector.broadcast %cst_93 : f32 to vector<1x1x8xf32>
    %76 = arith.divf %74, %75 : vector<1x1x8xf32>
    %77 = arith.mulf %72, %72 : vector<1x64x8xf32>
    %cst_94 = arith.constant dense<0.000000e+00> : vector<1x8xf32>
    %78 = vector.multi_reduction <add>, %77, %cst_94 [1] : vector<1x64x8xf32> to vector<1x8xf32>
    %79 = vector.shape_cast %78 : vector<1x8xf32> to vector<1x1x8xf32>
    %cst_95 = arith.constant 6.400000e+01 : f32
    %80 = vector.broadcast %cst_95 : f32 to vector<1x1x8xf32>
    %81 = arith.divf %79, %80 : vector<1x1x8xf32>
    %82 = arith.mulf %76, %76 : vector<1x1x8xf32>
    %83 = arith.subf %81, %82 : vector<1x1x8xf32>
    %cst_96 = arith.constant 0.000000e+00 : f32
    %84 = vector.broadcast %cst_96 : f32 to vector<1x1x8xf32>
    %85 = arith.maximumf %83, %84 : vector<1x1x8xf32>
    %86 = vector.broadcast %76 : vector<1x1x8xf32> to vector<1x64x8xf32>
    %87 = arith.subf %72, %86 : vector<1x64x8xf32>
    %cst_97 = arith.constant 9.99999974E-6 : f32
    %88 = vector.broadcast %cst_97 : f32 to vector<1x1x8xf32>
    %89 = arith.addf %85, %88 : vector<1x1x8xf32>
    %90 = math.rsqrt %89 : vector<1x1x8xf32>
    %91 = vector.broadcast %90 : vector<1x1x8xf32> to vector<1x64x8xf32>
    %92 = arith.mulf %87, %91 : vector<1x64x8xf32>
    %93 = vector.shape_cast %92 : vector<1x64x8xf32> to vector<64x8xf32>
    %c0_98 = arith.constant 0 : index
    %c0_99 = arith.constant 0 : index
    %94 = vector.load %arg7[%c0_98, %c0_99] : memref<64x8xf32, #tpu.memory_space<vmem>>, vector<64x8xf32>
    %95 = vector.shape_cast %94 : vector<64x8xf32> to vector<1x64x8xf32>
    %cst_100 = arith.constant dense<0.000000e+00> : vector<1x8xf32>
    %96 = vector.multi_reduction <add>, %95, %cst_100 [1] : vector<1x64x8xf32> to vector<1x8xf32>
    %97 = vector.shape_cast %96 : vector<1x8xf32> to vector<1x1x8xf32>
    %cst_101 = arith.constant 6.400000e+01 : f32
    %98 = vector.broadcast %cst_101 : f32 to vector<1x1x8xf32>
    %99 = arith.divf %97, %98 : vector<1x1x8xf32>
    %100 = arith.mulf %95, %95 : vector<1x64x8xf32>
    %cst_102 = arith.constant dense<0.000000e+00> : vector<1x8xf32>
    %101 = vector.multi_reduction <add>, %100, %cst_102 [1] : vector<1x64x8xf32> to vector<1x8xf32>
    %102 = vector.shape_cast %101 : vector<1x8xf32> to vector<1x1x8xf32>
    %cst_103 = arith.constant 6.400000e+01 : f32
    %103 = vector.broadcast %cst_103 : f32 to vector<1x1x8xf32>
    %104 = arith.divf %102, %103 : vector<1x1x8xf32>
    %105 = arith.mulf %99, %99 : vector<1x1x8xf32>
    %106 = arith.subf %104, %105 : vector<1x1x8xf32>
    %cst_104 = arith.constant 0.000000e+00 : f32
    %107 = vector.broadcast %cst_104 : f32 to vector<1x1x8xf32>
    %108 = arith.maximumf %106, %107 : vector<1x1x8xf32>
    %109 = vector.broadcast %99 : vector<1x1x8xf32> to vector<1x64x8xf32>
    %110 = arith.subf %95, %109 : vector<1x64x8xf32>
    %cst_105 = arith.constant 9.99999974E-6 : f32
    %111 = vector.broadcast %cst_105 : f32 to vector<1x1x8xf32>
    %112 = arith.addf %108, %111 : vector<1x1x8xf32>
    %113 = math.rsqrt %112 : vector<1x1x8xf32>
    %114 = vector.broadcast %113 : vector<1x1x8xf32> to vector<1x64x8xf32>
    %115 = arith.mulf %110, %114 : vector<1x64x8xf32>
    %cst_106 = arith.constant 0.000000e+00 : f32
    %116 = vector.broadcast %cst_106 : f32 to vector<1x64x8xf32>
    %117 = arith.maximumf %115, %116 : vector<1x64x8xf32>
    %cst_107 = arith.constant 0.000000e+00 : f32
    %118 = vector.broadcast %cst_107 : f32 to vector<1x1x16x8xf32>
    %c0_108 = arith.constant 0 : index
    %c0_109 = arith.constant 0 : index
    %c0_110 = arith.constant 0 : index
    %c0_111 = arith.constant 0 : index
    %119 = vector.load %arg6[%c0_108, %c0_109, %c0_110, %c0_111] : memref<1x10x16x8xf32, #tpu.memory_space<vmem>>, vector<1x1x16x8xf32>
    tpu.vector_store %arg6[%c0_108, %c0_109, %c0_110, %c0_111], %118 {strides = array<i32>} : memref<1x10x16x8xf32, #tpu.memory_space<vmem>>, vector<1x1x16x8xf32>,
    %c0_112 = arith.constant 0 : index
    %c9_113 = arith.constant 9 : index
    %c0_114 = arith.constant 0 : index
    %c0_115 = arith.constant 0 : index
    %120 = vector.load %arg6[%c0_112, %c9_113, %c0_114, %c0_115] : memref<1x10x16x8xf32, #tpu.memory_space<vmem>>, vector<1x1x16x8xf32>
    tpu.vector_store %arg6[%c0_112, %c9_113, %c0_114, %c0_115], %118 {strides = array<i32>} : memref<1x10x16x8xf32, #tpu.memory_space<vmem>>, vector<1x1x16x8xf32>,
    %cst_116 = arith.constant 0.000000e+00 : f32
    %121 = vector.broadcast %cst_116 : f32 to vector<1x8x1x8xf32>
    %c0_117 = arith.constant 0 : index
    %c1_118 = arith.constant 1 : index
    %c0_119 = arith.constant 0 : index
    %c0_120 = arith.constant 0 : index
    %122 = vector.load %arg6[%c0_117, %c1_118, %c0_119, %c0_120] : memref<1x10x16x8xf32, #tpu.memory_space<vmem>>, vector<1x8x1x8xf32>
    tpu.vector_store %arg6[%c0_117, %c1_118, %c0_119, %c0_120], %121 {strides = array<i32>} : memref<1x10x16x8xf32, #tpu.memory_space<vmem>>, vector<1x8x1x8xf32>,
    %cst_121 = arith.constant 0.000000e+00 : f32
    %123 = vector.broadcast %cst_121 : f32 to vector<1x8x1x8xf32>
    %c0_122 = arith.constant 0 : index
    %c1_123 = arith.constant 1 : index
    %c9_124 = arith.constant 9 : index
    %c0_125 = arith.constant 0 : index
    %124 = vector.load %arg6[%c0_122, %c1_123, %c9_124, %c0_125] : memref<1x10x16x8xf32, #tpu.memory_space<vmem>>, vector<1x8x1x8xf32>
    tpu.vector_store %arg6[%c0_122, %c1_123, %c9_124, %c0_125], %123 {strides = array<i32>} : memref<1x10x16x8xf32, #tpu.memory_space<vmem>>, vector<1x8x1x8xf32>,
    %125 = vector.shape_cast %117 : vector<1x64x8xf32> to vector<1x8x8x8xf32>
    %c0_126 = arith.constant 0 : index
    %c1_127 = arith.constant 1 : index
    %c1_128 = arith.constant 1 : index
    %c0_129 = arith.constant 0 : index
    %126 = vector.load %arg6[%c0_126, %c1_127, %c1_128, %c0_129] : memref<1x10x16x8xf32, #tpu.memory_space<vmem>>, vector<1x8x8x8xf32>
    tpu.vector_store %arg6[%c0_126, %c1_127, %c1_128, %c0_129], %125 {strides = array<i32>} : memref<1x10x16x8xf32, #tpu.memory_space<vmem>>, vector<1x8x8x8xf32>,
    %c0_130 = arith.constant 0 : index
    %c0_131 = arith.constant 0 : index
    %c0_132 = arith.constant 0 : index
    %c0_133 = arith.constant 0 : index
    %127 = vector.load %arg6[%c0_130, %c0_131, %c0_132, %c0_133] : memref<1x10x16x8xf32, #tpu.memory_space<vmem>>, vector<1x8x8x8xf32>
    %128 = vector.shape_cast %127 : vector<1x8x8x8xf32> to vector<64x8xf32>
    %129 = arith.truncf %128 : vector<64x8xf32> to vector<64x8xbf16>
    %c0_134 = arith.constant 0 : index
    %c0_135 = arith.constant 0 : index
    %c0_136 = arith.constant 0 : index
    %130 = vector.load %arg3[%c0_134, %c0_135, %c0_136] : memref<9x8x8xbf16, #tpu.memory_space<vmem>>, vector<1x8x8xbf16>
    %131 = vector.shape_cast %130 : vector<1x8x8xbf16> to vector<8x8xbf16>
    %cst_137 = arith.constant dense<0.000000e+00> : vector<64x8xf32>
    %132 = tpu.matmul %129, %131, %cst_137 {dimension_numbers = #tpu.dot_dimension_numbers<[1], [0], [0], [1], [0, 0, 1, 1], [], []>} : vector<64x8xbf16>, vector<8x8xbf16>, vector<64x8xf32> -> vector<64x8xf32>
    %c0_138 = arith.constant 0 : index
    %c0_139 = arith.constant 0 : index
    %133 = vector.load %arg7[%c0_138, %c0_139] : memref<64x8xf32, #tpu.memory_space<vmem>>, vector<64x8xf32>
    tpu.vector_store %arg7[%c0_138, %c0_139], %132 {strides = array<i32>} : memref<64x8xf32, #tpu.memory_space<vmem>>, vector<64x8xf32>,
    %c0_140 = arith.constant 0 : index
    %c0_141 = arith.constant 0 : index
    %c1_142 = arith.constant 1 : index
    %c0_143 = arith.constant 0 : index
    %134 = vector.load %arg6[%c0_140, %c0_141, %c1_142, %c0_143] : memref<1x10x16x8xf32, #tpu.memory_space<vmem>>, vector<1x8x8x8xf32>
    %135 = vector.shape_cast %134 : vector<1x8x8x8xf32> to vector<64x8xf32>
    %136 = arith.truncf %135 : vector<64x8xf32> to vector<64x8xbf16>
    %c1_144 = arith.constant 1 : index
    %c0_145 = arith.constant 0 : index
    %c0_146 = arith.constant 0 : index
    %137 = vector.load %arg3[%c1_144, %c0_145, %c0_146] : memref<9x8x8xbf16, #tpu.memory_space<vmem>>, vector<1x8x8xbf16>
    %138 = vector.shape_cast %137 : vector<1x8x8xbf16> to vector<8x8xbf16>
    %cst_147 = arith.constant dense<0.000000e+00> : vector<64x8xf32>
    %139 = tpu.matmul %136, %138, %cst_147 {dimension_numbers = #tpu.dot_dimension_numbers<[1], [0], [0], [1], [0, 0, 1, 1], [], []>} : vector<64x8xbf16>, vector<8x8xbf16>, vector<64x8xf32> -> vector<64x8xf32>
    %c0_148 = arith.constant 0 : index
    %c0_149 = arith.constant 0 : index
    %140 = vector.load %arg7[%c0_148, %c0_149] : memref<64x8xf32, #tpu.memory_space<vmem>>, vector<64x8xf32>
    %141 = arith.addf %140, %139 : vector<64x8xf32>
    %c0_150 = arith.constant 0 : index
    %c0_151 = arith.constant 0 : index
    %142 = vector.load %arg7[%c0_150, %c0_151] : memref<64x8xf32, #tpu.memory_space<vmem>>, vector<64x8xf32>
    tpu.vector_store %arg7[%c0_150, %c0_151], %141 {strides = array<i32>} : memref<64x8xf32, #tpu.memory_space<vmem>>, vector<64x8xf32>,
    %c0_152 = arith.constant 0 : index
    %c0_153 = arith.constant 0 : index
    %c2_154 = arith.constant 2 : index
    %c0_155 = arith.constant 0 : index
    %143 = vector.load %arg6[%c0_152, %c0_153, %c2_154, %c0_155] : memref<1x10x16x8xf32, #tpu.memory_space<vmem>>, vector<1x8x8x8xf32>
    %144 = vector.shape_cast %143 : vector<1x8x8x8xf32> to vector<64x8xf32>
    %145 = arith.truncf %144 : vector<64x8xf32> to vector<64x8xbf16>
    %c2_156 = arith.constant 2 : index
    %c0_157 = arith.constant 0 : index
    %c0_158 = arith.constant 0 : index
    %146 = vector.load %arg3[%c2_156, %c0_157, %c0_158] : memref<9x8x8xbf16, #tpu.memory_space<vmem>>, vector<1x8x8xbf16>
    %147 = vector.shape_cast %146 : vector<1x8x8xbf16> to vector<8x8xbf16>
    %cst_159 = arith.constant dense<0.000000e+00> : vector<64x8xf32>
    %148 = tpu.matmul %145, %147, %cst_159 {dimension_numbers = #tpu.dot_dimension_numbers<[1], [0], [0], [1], [0, 0, 1, 1], [], []>} : vector<64x8xbf16>, vector<8x8xbf16>, vector<64x8xf32> -> vector<64x8xf32>
    %c0_160 = arith.constant 0 : index
    %c0_161 = arith.constant 0 : index
    %149 = vector.load %arg7[%c0_160, %c0_161] : memref<64x8xf32, #tpu.memory_space<vmem>>, vector<64x8xf32>
    %150 = arith.addf %149, %148 : vector<64x8xf32>
    %c0_162 = arith.constant 0 : index
    %c0_163 = arith.constant 0 : index
    %151 = vector.load %arg7[%c0_162, %c0_163] : memref<64x8xf32, #tpu.memory_space<vmem>>, vector<64x8xf32>
    tpu.vector_store %arg7[%c0_162, %c0_163], %150 {strides = array<i32>} : memref<64x8xf32, #tpu.memory_space<vmem>>, vector<64x8xf32>,
    %c0_164 = arith.constant 0 : index
    %c1_165 = arith.constant 1 : index
    %c0_166 = arith.constant 0 : index
    %c0_167 = arith.constant 0 : index
    %152 = vector.load %arg6[%c0_164, %c1_165, %c0_166, %c0_167] : memref<1x10x16x8xf32, #tpu.memory_space<vmem>>, vector<1x8x8x8xf32>
    %153 = vector.shape_cast %152 : vector<1x8x8x8xf32> to vector<64x8xf32>
    %154 = arith.truncf %153 : vector<64x8xf32> to vector<64x8xbf16>
    %c3_168 = arith.constant 3 : index
    %c0_169 = arith.constant 0 : index
    %c0_170 = arith.constant 0 : index
    %155 = vector.load %arg3[%c3_168, %c0_169, %c0_170] : memref<9x8x8xbf16, #tpu.memory_space<vmem>>, vector<1x8x8xbf16>
    %156 = vector.shape_cast %155 : vector<1x8x8xbf16> to vector<8x8xbf16>
    %cst_171 = arith.constant dense<0.000000e+00> : vector<64x8xf32>
    %157 = tpu.matmul %154, %156, %cst_171 {dimension_numbers = #tpu.dot_dimension_numbers<[1], [0], [0], [1], [0, 0, 1, 1], [], []>} : vector<64x8xbf16>, vector<8x8xbf16>, vector<64x8xf32> -> vector<64x8xf32>
    %c0_172 = arith.constant 0 : index
    %c0_173 = arith.constant 0 : index
    %158 = vector.load %arg7[%c0_172, %c0_173] : memref<64x8xf32, #tpu.memory_space<vmem>>, vector<64x8xf32>
    %159 = arith.addf %158, %157 : vector<64x8xf32>
    %c0_174 = arith.constant 0 : index
    %c0_175 = arith.constant 0 : index
    %160 = vector.load %arg7[%c0_174, %c0_175] : memref<64x8xf32, #tpu.memory_space<vmem>>, vector<64x8xf32>
    tpu.vector_store %arg7[%c0_174, %c0_175], %159 {strides = array<i32>} : memref<64x8xf32, #tpu.memory_space<vmem>>, vector<64x8xf32>,
    %c0_176 = arith.constant 0 : index
    %c1_177 = arith.constant 1 : index
    %c1_178 = arith.constant 1 : index
    %c0_179 = arith.constant 0 : index
    %161 = vector.load %arg6[%c0_176, %c1_177, %c1_178, %c0_179] : memref<1x10x16x8xf32, #tpu.memory_space<vmem>>, vector<1x8x8x8xf32>
    %162 = vector.shape_cast %161 : vector<1x8x8x8xf32> to vector<64x8xf32>
    %163 = arith.truncf %162 : vector<64x8xf32> to vector<64x8xbf16>
    %c4_180 = arith.constant 4 : index
    %c0_181 = arith.constant 0 : index
    %c0_182 = arith.constant 0 : index
    %164 = vector.load %arg3[%c4_180, %c0_181, %c0_182] : memref<9x8x8xbf16, #tpu.memory_space<vmem>>, vector<1x8x8xbf16>
    %165 = vector.shape_cast %164 : vector<1x8x8xbf16> to vector<8x8xbf16>
    %cst_183 = arith.constant dense<0.000000e+00> : vector<64x8xf32>
    %166 = tpu.matmul %163, %165, %cst_183 {dimension_numbers = #tpu.dot_dimension_numbers<[1], [0], [0], [1], [0, 0, 1, 1], [], []>} : vector<64x8xbf16>, vector<8x8xbf16>, vector<64x8xf32> -> vector<64x8xf32>
    %c0_184 = arith.constant 0 : index
    %c0_185 = arith.constant 0 : index
    %167 = vector.load %arg7[%c0_184, %c0_185] : memref<64x8xf32, #tpu.memory_space<vmem>>, vector<64x8xf32>
    %168 = arith.addf %167, %166 : vector<64x8xf32>
    %c0_186 = arith.constant 0 : index
    %c0_187 = arith.constant 0 : index
    %169 = vector.load %arg7[%c0_186, %c0_187] : memref<64x8xf32, #tpu.memory_space<vmem>>, vector<64x8xf32>
    tpu.vector_store %arg7[%c0_186, %c0_187], %168 {strides = array<i32>} : memref<64x8xf32, #tpu.memory_space<vmem>>, vector<64x8xf32>,
    %c0_188 = arith.constant 0 : index
    %c1_189 = arith.constant 1 : index
    %c2_190 = arith.constant 2 : index
    %c0_191 = arith.constant 0 : index
    %170 = vector.load %arg6[%c0_188, %c1_189, %c2_190, %c0_191] : memref<1x10x16x8xf32, #tpu.memory_space<vmem>>, vector<1x8x8x8xf32>
    %171 = vector.shape_cast %170 : vector<1x8x8x8xf32> to vector<64x8xf32>
    %172 = arith.truncf %171 : vector<64x8xf32> to vector<64x8xbf16>
    %c5_192 = arith.constant 5 : index
    %c0_193 = arith.constant 0 : index
    %c0_194 = arith.constant 0 : index
    %173 = vector.load %arg3[%c5_192, %c0_193, %c0_194] : memref<9x8x8xbf16, #tpu.memory_space<vmem>>, vector<1x8x8xbf16>
    %174 = vector.shape_cast %173 : vector<1x8x8xbf16> to vector<8x8xbf16>
    %cst_195 = arith.constant dense<0.000000e+00> : vector<64x8xf32>
    %175 = tpu.matmul %172, %174, %cst_195 {dimension_numbers = #tpu.dot_dimension_numbers<[1], [0], [0], [1], [0, 0, 1, 1], [], []>} : vector<64x8xbf16>, vector<8x8xbf16>, vector<64x8xf32> -> vector<64x8xf32>
    %c0_196 = arith.constant 0 : index
    %c0_197 = arith.constant 0 : index
    %176 = vector.load %arg7[%c0_196, %c0_197] : memref<64x8xf32, #tpu.memory_space<vmem>>, vector<64x8xf32>
    %177 = arith.addf %176, %175 : vector<64x8xf32>
    %c0_198 = arith.constant 0 : index
    %c0_199 = arith.constant 0 : index
    %178 = vector.load %arg7[%c0_198, %c0_199] : memref<64x8xf32, #tpu.memory_space<vmem>>, vector<64x8xf32>
    tpu.vector_store %arg7[%c0_198, %c0_199], %177 {strides = array<i32>} : memref<64x8xf32, #tpu.memory_space<vmem>>, vector<64x8xf32>,
    %c0_200 = arith.constant 0 : index
    %c2_201 = arith.constant 2 : index
    %c0_202 = arith.constant 0 : index
    %c0_203 = arith.constant 0 : index
    %179 = vector.load %arg6[%c0_200, %c2_201, %c0_202, %c0_203] : memref<1x10x16x8xf32, #tpu.memory_space<vmem>>, vector<1x8x8x8xf32>
    %180 = vector.shape_cast %179 : vector<1x8x8x8xf32> to vector<64x8xf32>
    %181 = arith.truncf %180 : vector<64x8xf32> to vector<64x8xbf16>
    %c6_204 = arith.constant 6 : index
    %c0_205 = arith.constant 0 : index
    %c0_206 = arith.constant 0 : index
    %182 = vector.load %arg3[%c6_204, %c0_205, %c0_206] : memref<9x8x8xbf16, #tpu.memory_space<vmem>>, vector<1x8x8xbf16>
    %183 = vector.shape_cast %182 : vector<1x8x8xbf16> to vector<8x8xbf16>
    %cst_207 = arith.constant dense<0.000000e+00> : vector<64x8xf32>
    %184 = tpu.matmul %181, %183, %cst_207 {dimension_numbers = #tpu.dot_dimension_numbers<[1], [0], [0], [1], [0, 0, 1, 1], [], []>} : vector<64x8xbf16>, vector<8x8xbf16>, vector<64x8xf32> -> vector<64x8xf32>
    %c0_208 = arith.constant 0 : index
    %c0_209 = arith.constant 0 : index
    %185 = vector.load %arg7[%c0_208, %c0_209] : memref<64x8xf32, #tpu.memory_space<vmem>>, vector<64x8xf32>
    %186 = arith.addf %185, %184 : vector<64x8xf32>
    %c0_210 = arith.constant 0 : index
    %c0_211 = arith.constant 0 : index
    %187 = vector.load %arg7[%c0_210, %c0_211] : memref<64x8xf32, #tpu.memory_space<vmem>>, vector<64x8xf32>
    tpu.vector_store %arg7[%c0_210, %c0_211], %186 {strides = array<i32>} : memref<64x8xf32, #tpu.memory_space<vmem>>, vector<64x8xf32>,
    %c0_212 = arith.constant 0 : index
    %c2_213 = arith.constant 2 : index
    %c1_214 = arith.constant 1 : index
    %c0_215 = arith.constant 0 : index
    %188 = vector.load %arg6[%c0_212, %c2_213, %c1_214, %c0_215] : memref<1x10x16x8xf32, #tpu.memory_space<vmem>>, vector<1x8x8x8xf32>
    %189 = vector.shape_cast %188 : vector<1x8x8x8xf32> to vector<64x8xf32>
    %190 = arith.truncf %189 : vector<64x8xf32> to vector<64x8xbf16>
    %c7_216 = arith.constant 7 : index
    %c0_217 = arith.constant 0 : index
    %c0_218 = arith.constant 0 : index
    %191 = vector.load %arg3[%c7_216, %c0_217, %c0_218] : memref<9x8x8xbf16, #tpu.memory_space<vmem>>, vector<1x8x8xbf16>
    %192 = vector.shape_cast %191 : vector<1x8x8xbf16> to vector<8x8xbf16>
    %cst_219 = arith.constant dense<0.000000e+00> : vector<64x8xf32>
    %193 = tpu.matmul %190, %192, %cst_219 {dimension_numbers = #tpu.dot_dimension_numbers<[1], [0], [0], [1], [0, 0, 1, 1], [], []>} : vector<64x8xbf16>, vector<8x8xbf16>, vector<64x8xf32> -> vector<64x8xf32>
    %c0_220 = arith.constant 0 : index
    %c0_221 = arith.constant 0 : index
    %194 = vector.load %arg7[%c0_220, %c0_221] : memref<64x8xf32, #tpu.memory_space<vmem>>, vector<64x8xf32>
    %195 = arith.addf %194, %193 : vector<64x8xf32>
    %c0_222 = arith.constant 0 : index
    %c0_223 = arith.constant 0 : index
    %196 = vector.load %arg7[%c0_222, %c0_223] : memref<64x8xf32, #tpu.memory_space<vmem>>, vector<64x8xf32>
    tpu.vector_store %arg7[%c0_222, %c0_223], %195 {strides = array<i32>} : memref<64x8xf32, #tpu.memory_space<vmem>>, vector<64x8xf32>,
    %c0_224 = arith.constant 0 : index
    %c2_225 = arith.constant 2 : index
    %c2_226 = arith.constant 2 : index
    %c0_227 = arith.constant 0 : index
    %197 = vector.load %arg6[%c0_224, %c2_225, %c2_226, %c0_227] : memref<1x10x16x8xf32, #tpu.memory_space<vmem>>, vector<1x8x8x8xf32>
    %198 = vector.shape_cast %197 : vector<1x8x8x8xf32> to vector<64x8xf32>
    %199 = arith.truncf %198 : vector<64x8xf32> to vector<64x8xbf16>
    %c8_228 = arith.constant 8 : index
    %c0_229 = arith.constant 0 : index
    %c0_230 = arith.constant 0 : index
    %200 = vector.load %arg3[%c8_228, %c0_229, %c0_230] : memref<9x8x8xbf16, #tpu.memory_space<vmem>>, vector<1x8x8xbf16>
    %201 = vector.shape_cast %200 : vector<1x8x8xbf16> to vector<8x8xbf16>
    %cst_231 = arith.constant dense<0.000000e+00> : vector<64x8xf32>
    %202 = tpu.matmul %199, %201, %cst_231 {dimension_numbers = #tpu.dot_dimension_numbers<[1], [0], [0], [1], [0, 0, 1, 1], [], []>} : vector<64x8xbf16>, vector<8x8xbf16>, vector<64x8xf32> -> vector<64x8xf32>
    %c0_232 = arith.constant 0 : index
    %c0_233 = arith.constant 0 : index
    %203 = vector.load %arg7[%c0_232, %c0_233] : memref<64x8xf32, #tpu.memory_space<vmem>>, vector<64x8xf32>
    %204 = arith.addf %203, %202 : vector<64x8xf32>
    %c0_234 = arith.constant 0 : index
    %c0_235 = arith.constant 0 : index
    %205 = vector.load %arg7[%c0_234, %c0_235] : memref<64x8xf32, #tpu.memory_space<vmem>>, vector<64x8xf32>
    tpu.vector_store %arg7[%c0_234, %c0_235], %204 {strides = array<i32>} : memref<64x8xf32, #tpu.memory_space<vmem>>, vector<64x8xf32>,
    %c0_236 = arith.constant 0 : index
    %c0_237 = arith.constant 0 : index
    %206 = vector.load %arg7[%c0_236, %c0_237] : memref<64x8xf32, #tpu.memory_space<vmem>>, vector<64x8xf32>
    %207 = vector.shape_cast %206 : vector<64x8xf32> to vector<1x64x8xf32>
    %cst_238 = arith.constant dense<0.000000e+00> : vector<1x8xf32>
    %208 = vector.multi_reduction <add>, %207, %cst_238 [1] : vector<1x64x8xf32> to vector<1x8xf32>
    %209 = vector.shape_cast %208 : vector<1x8xf32> to vector<1x1x8xf32>
    %cst_239 = arith.constant 6.400000e+01 : f32
    %210 = vector.broadcast %cst_239 : f32 to vector<1x1x8xf32>
    %211 = arith.divf %209, %210 : vector<1x1x8xf32>
    %212 = arith.mulf %207, %207 : vector<1x64x8xf32>
    %cst_240 = arith.constant dense<0.000000e+00> : vector<1x8xf32>
    %213 = vector.multi_reduction <add>, %212, %cst_240 [1] : vector<1x64x8xf32> to vector<1x8xf32>
    %214 = vector.shape_cast %213 : vector<1x8xf32> to vector<1x1x8xf32>
    %cst_241 = arith.constant 6.400000e+01 : f32
    %215 = vector.broadcast %cst_241 : f32 to vector<1x1x8xf32>
    %216 = arith.divf %214, %215 : vector<1x1x8xf32>
    %217 = arith.mulf %211, %211 : vector<1x1x8xf32>
    %218 = arith.subf %216, %217 : vector<1x1x8xf32>
    %cst_242 = arith.constant 0.000000e+00 : f32
    %219 = vector.broadcast %cst_242 : f32 to vector<1x1x8xf32>
    %220 = arith.maximumf %218, %219 : vector<1x1x8xf32>
    %221 = vector.broadcast %211 : vector<1x1x8xf32> to vector<1x64x8xf32>
    %222 = arith.subf %207, %221 : vector<1x64x8xf32>
    %cst_243 = arith.constant 9.99999974E-6 : f32
    %223 = vector.broadcast %cst_243 : f32 to vector<1x1x8xf32>
    %224 = arith.addf %220, %223 : vector<1x1x8xf32>
    %225 = math.rsqrt %224 : vector<1x1x8xf32>
    %226 = vector.broadcast %225 : vector<1x1x8xf32> to vector<1x64x8xf32>
    %227 = arith.mulf %222, %226 : vector<1x64x8xf32>
    %228 = vector.shape_cast %227 : vector<1x64x8xf32> to vector<64x8xf32>
    %229 = arith.addf %228, %93 : vector<64x8xf32>
    %cst_244 = arith.constant 0.000000e+00 : f32
    %230 = vector.broadcast %cst_244 : f32 to vector<64x8xf32>
    %231 = arith.maximumf %229, %230 : vector<64x8xf32>
    %232 = tpu.iota {dimensions = array<i32: 0>} : vector<8x8xi32>
    %233 = tpu.iota {dimensions = array<i32: 1>} : vector<8x8xi32>
    %234 = arith.cmpi eq, %232, %233 : vector<8x8xi32>
    %235 = arith.extui %234 : vector<8x8xi1> to vector<8x8xi32>
    %236 = arith.sitofp %235 : vector<8x8xi32> to vector<8x8xf32>
    %cst_245 = arith.constant dense<0.000000e+00> : vector<8x64xf32>
    %237 = tpu.matmul %236, %231, %cst_245 {dimension_numbers = #tpu.dot_dimension_numbers<[1], [1], [0], [0], [0, 0, 1, 0], [], []>} : vector<8x8xf32>, vector<64x8xf32>, vector<8x64xf32> -> vector<8x64xf32>
    %cst_246 = arith.constant 0.000000e+00 : f32
    %238 = vector.broadcast %cst_246 : f32 to vector<8x64xf32>
    %239 = tpu.concatenate %237, %238 in 1 : vector<8x64xf32>, vector<8x64xf32> -> vector<8x128xf32>
    %c0_247 = arith.constant 0 : index
    %c0_248 = arith.constant 0 : index
    %240 = vector.load %arg5[%c0_247, %c0_248] : memref<8x128xf32, #tpu.memory_space<vmem>>, vector<8x128xf32>
    tpu.vector_store %arg5[%c0_247, %c0_248], %239 {strides = array<i32>} : memref<8x128xf32, #tpu.memory_space<vmem>>, vector<8x128xf32>,
    return
  }
  func.func @transform_0(%arg0: i32) -> (i32, i32, i32, i32) {
    %c0_i32 = arith.constant 0 : i32
    %c0_i32_0 = arith.constant 0 : i32
    %c0_i32_1 = arith.constant 0 : i32
    %c0_i32_2 = arith.constant 0 : i32
    return %arg0, %c0_i32, %c0_i32_0, %c0_i32_1 : i32, i32, i32, i32
  }
  func.func @transform_1(%arg0: i32) -> (i32, i32, i32) {
    %c0_i32 = arith.constant 0 : i32
    %c0_i32_0 = arith.constant 0 : i32
    %c0_i32_1 = arith.constant 0 : i32
    %c0_i32_2 = arith.constant 0 : i32
    return %c0_i32, %c0_i32_0, %c0_i32_1 : i32, i32, i32
  }
  func.func @transform_2(%arg0: i32) -> (i32, i32, i32) {
    %c0_i32 = arith.constant 0 : i32
    %c0_i32_0 = arith.constant 0 : i32
    %c0_i32_1 = arith.constant 0 : i32
    %c0_i32_2 = arith.constant 0 : i32
    return %c0_i32, %c0_i32_0, %c0_i32_1 : i32, i32, i32
  }
  func.func @transform_3(%arg0: i32) -> (i32, i32) {
    %c0_i32 = arith.constant 0 : i32
    %c0_i32_0 = arith.constant 0 : i32
    %c0_i32_1 = arith.constant 0 : i32
    return %c0_i32, %c0_i32_0 : i32, i32
  }
  func.func @transform_4(%arg0: i32) -> (i32, i32) {
    %c0_i32 = arith.constant 0 : i32
    %c0_i32_0 = arith.constant 0 : i32
    return %c0_i32, %arg0 : i32, i32
  }
}

</mosaic_0001>

<llo_original>
// kernel: tpu_custom_call.1
$region0: #{tpu_custom_call.1}
  #allocation0 [shape = 'u32[]', space=smem, size = 0x4, offset = 0x4, fixed_abs, tag = 'smem constant byte address 0x4 - core index']
  #allocation1 [shape = 'u32[72,128]{1,0:T(1,128)}', space=vmem, size = 0x9000, scoped, tag = 'internal scratch']
  #allocation2 [shape = 'f32[1,10,16,8]{3,2,1,0:T(8,128)}', space=vmem, size = 0x14000, scoped, tag = 'scratch operand']
  #allocation3 [shape = 'f32[64,8]{1,0:T(8,128)}', space=vmem, size = 0x8000, scoped, tag = 'scratch operand']
  %s0 = inlined_call_operand.vmem [shape: bf16[2,54,8,4], index: 0, kind: input, shape index: {}]
  %s1 = inlined_call_operand.vmem [shape: bf16[9,4,8], index: 1, kind: input, shape index: {}]
  %s2 = inlined_call_operand.vmem [shape: bf16[9,8,8], index: 2, kind: input, shape index: {}]
  %s3 = inlined_call_operand.vmem [shape: bf16[4,8], index: 3, kind: input, shape index: {}]
  %s4 = inlined_call_operand.hbm [shape: f32[8,256], index: 4, kind: output, shape index: {}]
  %s5 = sld [smem:[#allocation0]]
  $region49: #{tpu_custom_call.1} parent=0
    _
  %s7 = ssub.s32 1, %s5
  %s8 = scalar_select 0, %s7, %s5
  $region1: #{tpu_custom_call.1} parent=0
    #allocation4 [shape = 'u8[8192]{0}', space=vmem, size = 0x2000, scoped, tag = 'output window, operand 0']
    #allocation5 [shape = 's32[2]{0}', space=sflag, size = 0x8, scoped, tag = 'scoped memory for tpu_custom_call.1']
    %9 = vsyncpa [#allocation5], 0
    %s10 = scalar_lea.sflag [#allocation5], 1
    %11 = vsyncpa %s10, 0
    loop: start=0, step=1, limit=4
    $region2: #{tpu_custom_call.1} parent=1 // loop_pre_header
      _
    $region3: #{tpu_custom_call.1} parent=1 // loop_header
      %s13 = sphi 0, %s17
      %p14 = scmp.ge.s32.totalorder %s13, 4
      %s23 = sphi 0, %s25
      %s26 = sphi 0, %s23
      %s27 = sphi 0, %s26
      %s43 = sphi 0, %s27
      %s47 = sphi 0, %s47
      %s49 = sphi 0, %s47
      %s50 = sphi 0, %s49
      %s64 = sphi 0, %s50
      %s68 = sphi 0, %s68
      %s70 = sphi 0, %s68
      %s71 = sphi 0, %s70
      %s85 = sphi 0, %s71
      %s89 = sphi 0, %s89
      %s91 = sphi 0, %s89
      %s92 = sphi 0, %s91
      %s106 = sphi 0, %s92
      %s112 = sphi 0, %s114
      %s115 = sphi 0, %s112
      %s116 = sphi 0, %s115
      %s132 = sphi 0, %s116
    $region4: #{tpu_custom_call.1} parent=1 // loop_header_branch
      %16 = sbr.rel (%p14) target = $region8
    $region5: #{tpu_custom_call.1} parent=1 // loop_body
      %s18 = ssub.s32 %s13, 1
      %s19 = ssub.s32 %s13, 2
      %s20 = sadd.s32 %s13, 1
      %s21 = ssub.s32 %s13, %s20
      %p22 = scmp.eq.s32.totalorder %s21, 0
      %s24 = sadd.s32 %s23, 1
      %s25 = scalar_select %p22, %s23, %s24
      %p28 = pneg %p22
      %p29 = scmp.eq.s32.totalorder %s13, 1
      %p30 = por %p28, %p29
      %p31 = scmp.ne.s32.totalorder %s23, %s26
      %p32 = scmp.eq.s32.totalorder %s13, 0
      %p33 = por %p31, %p32
      %p34 = scmp.ne.s32.totalorder %s23, %s26
      %p35 = scmp.eq.s32.totalorder %s18, 1
      %p36 = por %p34, %p35
      %p37 = scmp.ne.s32.totalorder %s26, %s27
      %p38 = scmp.eq.s32.totalorder %s18, 0
      %p39 = por %p37, %p38
      %p40 = scmp.ne.s32.totalorder %s26, %s27
      %p41 = scmp.eq.s32.totalorder %s19, 1
      %p42 = por %p40, %p41
      %p44 = scmp.ne.s32.totalorder %s27, %s43
      %p45 = scmp.eq.s32.totalorder %s19, 0
      %p46 = por %p44, %p45
      %s48 = sadd.s32 %s47, 1
      %p51 = scmp.eq.s32.totalorder %s13, 1
      %p52 = scmp.ne.s32.totalorder %s47, %s49
      %p53 = scmp.eq.s32.totalorder %s13, 0
      %p54 = por %p52, %p53
      %p55 = scmp.ne.s32.totalorder %s47, %s49
      %p56 = scmp.eq.s32.totalorder %s18, 1
      %p57 = por %p55, %p56
      %p58 = scmp.ne.s32.totalorder %s49, %s50
      %p59 = scmp.eq.s32.totalorder %s18, 0
      %p60 = por %p58, %p59
      %p61 = scmp.ne.s32.totalorder %s49, %s50
      %p62 = scmp.eq.s32.totalorder %s19, 1
      %p63 = por %p61, %p62
      %p65 = scmp.ne.s32.totalorder %s50, %s64
      %p66 = scmp.eq.s32.totalorder %s19, 0
      %p67 = por %p65, %p66
      %s69 = sadd.s32 %s68, 1
      %p72 = scmp.eq.s32.totalorder %s13, 1
      %p73 = scmp.ne.s32.totalorder %s68, %s70
      %p74 = scmp.eq.s32.totalorder %s13, 0
      %p75 = por %p73, %p74
      %p76 = scmp.ne.s32.totalorder %s68, %s70
      %p77 = scmp.eq.s32.totalorder %s18, 1
      %p78 = por %p76, %p77
      %p79 = scmp.ne.s32.totalorder %s70, %s71
      %p80 = scmp.eq.s32.totalorder %s18, 0
      %p81 = por %p79, %p80
      %p82 = scmp.ne.s32.totalorder %s70, %s71
      %p83 = scmp.eq.s32.totalorder %s19, 1
      %p84 = por %p82, %p83
      %p86 = scmp.ne.s32.totalorder %s71, %s85
      %p87 = scmp.eq.s32.totalorder %s19, 0
      %p88 = por %p86, %p87
      %s90 = sadd.s32 %s89, 1
      %p93 = scmp.eq.s32.totalorder %s13, 1
      %p94 = scmp.ne.s32.totalorder %s89, %s91
      %p95 = scmp.eq.s32.totalorder %s13, 0
      %p96 = por %p94, %p95
      %p97 = scmp.ne.s32.totalorder %s89, %s91
      %p98 = scmp.eq.s32.totalorder %s18, 1
      %p99 = por %p97, %p98
      %p100 = scmp.ne.s32.totalorder %s91, %s92
      %p101 = scmp.eq.s32.totalorder %s18, 0
      %p102 = por %p100, %p101
      %p103 = scmp.ne.s32.totalorder %s91, %s92
      %p104 = scmp.eq.s32.totalorder %s19, 1
      %p105 = por %p103, %p104
      %p107 = scmp.ne.s32.totalorder %s92, %s106
      %p108 = scmp.eq.s32.totalorder %s19, 0
      %p109 = por %p107, %p108
      %s110 = ssub.s32 %s13, %s20
      %p111 = scmp.eq.s32.totalorder %s110, 0
      %s113 = sadd.s32 %s112, 1
      %s114 = scalar_select %p111, %s112, %s113
      %p117 = pneg %p111
      %p118 = scmp.eq.s32.totalorder %s13, 1
      %p119 = por %p117, %p118
      %p120 = scmp.ne.s32.totalorder %s112, %s115
      %p121 = scmp.eq.s32.totalorder %s13, 0
      %p122 = por %p120, %p121
      %p123 = scmp.ne.s32.totalorder %s112, %s115
      %p124 = scmp.eq.s32.totalorder %s18, 1
      %p125 = por %p123, %p124
      %p126 = scmp.ne.s32.totalorder %s115, %s116
      %p127 = scmp.eq.s32.totalorder %s18, 0
      %p128 = por %p126, %p127
      %p129 = scmp.ne.s32.totalorder %s115, %s116
      %p130 = scmp.eq.s32.totalorder %s19, 1
      %p131 = por %p129, %p130
      %p133 = scmp.ne.s32.totalorder %s116, %s132
      %p134 = scmp.eq.s32.totalorder %s19, 0
      %p135 = por %p133, %p134
      %p136 = scmp.le.s32.totalorder 1, %s13
      %p137 = scmp.lt.s32.totalorder %s13, 3
      %p138 = pnand %p136, %p137
      %p139 = pneg %p138
      // Predicated region
      $region9: #{tpu_custom_call.1} parent=5 // pred_check
        _
      $region10: #{tpu_custom_call.1} parent=5 // pred_check_branch
        %141 = sbr.rel (%p138) target = $region12
      $region11: #{tpu_custom_call.1} parent=5 // pred_region
        %s142 = ssub.s32 %s13, 1
        // Predicated region
        $region13: #{tpu_custom_call.1} parent=11 // pred_check
          %p143 = pneg %p60
        $region14: #{tpu_custom_call.1} parent=11 // pred_check_branch
          %145 = sbr.rel (%p143) target = $region16
        $region15: #{tpu_custom_call.1} parent=11 // pred_region
          _
        $region16: #{tpu_custom_call.1} parent=11 // pred_fallthru
          _
        // Predicated region
        $region17: #{tpu_custom_call.1} parent=11 // pred_check
          %p146 = pneg %p81
        $region18: #{tpu_custom_call.1} parent=11 // pred_check_branch
          %148 = sbr.rel (%p146) target = $region20
        $region19: #{tpu_custom_call.1} parent=11 // pred_region
          _
        $region20: #{tpu_custom_call.1} parent=11 // pred_fallthru
          _
        // Predicated region
        $region21: #{tpu_custom_call.1} parent=11 // pred_check
          %p149 = pneg %p102
        $region22: #{tpu_custom_call.1} parent=11 // pred_check_branch
          %151 = sbr.rel (%p149) target = $region24
        $region23: #{tpu_custom_call.1} parent=11 // pred_region
          _
        $region24: #{tpu_custom_call.1} parent=11 // pred_fallthru
          _
      $region12: #{tpu_custom_call.1} parent=5 // pred_fallthru
        _
      %p152 = scmp.lt.s32.totalorder %s13, 2
      // Predicated region
      $region25: #{tpu_custom_call.1} parent=5 // pred_check
        %p153 = pneg %p152
      $region26: #{tpu_custom_call.1} parent=5 // pred_check_branch
        %155 = sbr.rel (%p153) target = $region28
      $region27: #{tpu_custom_call.1} parent=5 // pred_region
        // Predicated region
        $region29: #{tpu_custom_call.1} parent=27 // pred_check
          %p156 = pneg %p33
        $region30: #{tpu_custom_call.1} parent=27 // pred_check_branch
          %158 = sbr.rel (%p156) target = $region32
        $region31: #{tpu_custom_call.1} parent=27 // pred_region
          %p159 = scmp.lt.s32.totalorder %s13, 1
          %s160 = scalar_select %p159, %s13, 1
          %s161 = smul.addr %s160, 54
          %s162 = smul.addr %s161, 4
          %s163 = scalar_lea.vmem %s0, %s162
        $region32: #{tpu_custom_call.1} parent=27 // pred_fallthru
          _
      $region28: #{tpu_custom_call.1} parent=5 // pred_fallthru
        _
      %p164 = scmp.le.s32.totalorder 1, %s13
      %p165 = scmp.lt.s32.totalorder %s13, 3
      %p166 = pnand %p164, %p165
      %p167 = pneg %p166
      // Predicated region
      $region33: #{tpu_custom_call.1} parent=5 // pred_check
        _
      $region34: #{tpu_custom_call.1} parent=5 // pred_check_branch
        %169 = sbr.rel (%p166) target = $region36
      $region35: #{tpu_custom_call.1} parent=5 // pred_region
        %s170 = ssub.s32 %s13, 1
        %p171 = scmp.lt.s32.totalorder %s18, 1
        %s172 = scalar_select %p171, %s18, 1
        %s173 = smul.addr %s172, 54
        %s174 = smul.addr %s173, 4
        %s175 = scalar_lea.vmem %s0, %s174
        %p176 = pneg %p39
        %p177 = pneg %p36
        %p178 = pneg %p60
        %p179 = pneg %p57
        %p180 = pneg %p81
        %p181 = pneg %p78
        %p182 = pneg %p102
        %p183 = pneg %p99
        %p184 = pneg %p128
        %p185 = pneg %p125
        %s186 = sand.u32 %s115, 1
        %s187 = scalar_lea.sflag [#allocation5], %s186
        %s188 = sand.u32 %s115, 1
        %s189 = smul.addr %s188, 8
        %s190 = scalar_lea.vmem [#allocation4], %s189
        %p191 = scmp.lt.s32.totalorder %s18, 1
        %s192 = scalar_select %p191, %s18, 1
        %s193 = smul.addr %s192, 54
        %s194 = smul.addr %s193, 4
        %s195 = scalar_lea.vmem %s0, %s194
        %v197 = vld [vmem:[%s195] sm:$0xf]
        %v198 = vld [vmem:[%s195 + $0x4] sm:$0xf]
        %v199 = vld [vmem:[%s195 + $0x8] sm:$0xf]
        %v200 = vld [vmem:[%s195 + $0xc] sm:$0xf]
        %v201 = vld [vmem:[%s195 + $0x10] sm:$0xf]
        %v202 = vld [vmem:[%s195 + $0x14] sm:$0xf]
        %v203 = vld [vmem:[%s195 + $0x18] sm:$0xf]
        %v204 = vld [vmem:[%s195 + $0x1c] sm:$0xf]
        %v205 = vld [vmem:[%s1] sm:$0x3]
        %v214 = vunpack.c.l.b16 %v197
        %v215 = vunpack.c.l.b16 %v198
        %v216 = vunpack.c.l.b16 %v199
        %v217 = vunpack.c.l.b16 %v200
        %v218 = vunpack.c.l.b16 %v201
        %v219 = vunpack.c.l.b16 %v202
        %v220 = vunpack.c.l.b16 %v203
        %v221 = vunpack.c.l.b16 %v204
        %v222 = vpack.c.b16 %v215, %v214
        %v223 = vpack.c.b16 %v217, %v216
        %v224 = vpack.c.b16 %v219, %v218
        %v225 = vpack.c.b16 %v221, %v220
        %vm226 = vcmask 31744
        %v228 = vsel %vm226, %v222, 0
        %v231 = vsel %vm226, %v223, 0
        %v234 = vsel %vm226, %v224, 0
        %v237 = vsel %vm226, %v225, 0
        %vm239 = vcmask 1041408
        %v241 = vsel %vm239, %v205, 0
        %243 = vmatpush.bf16.msra.mxu0 0
        %244 = vmatpush.bf16.msra.mxu0 0
        %245 = vmatpush.bf16.msra.mxu0 0
        %246 = vmatpush.bf16.msra.mxu0 0
        %247 = vmatpush.bf16.msra.mxu0 0
        %248 = vmatpush.bf16.msra.mxu0 0
        %249 = vmatpush.bf16.msra.mxu0 0
        %250 = vmatpush.bf16.msra.mxu0 %v241
        %251 = vmatmul.bf16.gmra.mxu0 %v228
        %v252 = vpop.f32.mrf.mxu0
        %v253 = vadd.f32 0.0, %v252
        %v254 = vpop.f32.mrf.mxu0
        %v255 = vadd.f32 0.0, %v254
        %256 = vmatmul.bf16.gmra.mxu0 %v231
        %v257 = vpop.f32.mrf.mxu0
        %v258 = vadd.f32 0.0, %v257
        %v259 = vpop.f32.mrf.mxu0
        %v260 = vadd.f32 0.0, %v259
        %261 = vmatmul.bf16.gmra.mxu0 %v234
        %v262 = vpop.f32.mrf.mxu0
        %v263 = vadd.f32 0.0, %v262
        %v264 = vpop.f32.mrf.mxu0
        %v265 = vadd.f32 0.0, %v264
        %266 = vmatmul.bf16.gmra.mxu0 %v237
        %v267 = vpop.f32.mrf.mxu0
        %v268 = vadd.f32 0.0, %v267
        %v269 = vpop.f32.mrf.mxu0
        %v270 = vadd.f32 0.0, %v269
        %271 = vdwg.mxu0
        %vm272 = vcmask 64512
        %273 = vst.msk [vmem:[#allocation3] sm:$0xff] %vm272, %v253
        %274 = vst.msk [vmem:[#allocation3 + $0x8] sm:$0xff] %vm272, %v255
        %275 = vst.msk [vmem:[#allocation3 + $0x10] sm:$0xff] %vm272, %v258
        %276 = vst.msk [vmem:[#allocation3 + $0x18] sm:$0xff] %vm272, %v260
        %277 = vst.msk [vmem:[#allocation3 + $0x20] sm:$0xff] %vm272, %v263
        %278 = vst.msk [vmem:[#allocation3 + $0x28] sm:$0xff] %vm272, %v265
        %279 = vst.msk [vmem:[#allocation3 + $0x30] sm:$0xff] %vm272, %v268
        %280 = vst.msk [vmem:[#allocation3 + $0x38] sm:$0xff] %vm272, %v270
        %s281 = scalar_lea.vmem %s195, 72
        %v282 = vld [vmem:[%s281] sm:$0xf]
        %v283 = vld [vmem:[%s281 + $0x4] sm:$0xf]
        %v284 = vld [vmem:[%s281 + $0x8] sm:$0xf]
        %v285 = vld [vmem:[%s281 + $0xc] sm:$0xf]
        %v286 = vld [vmem:[%s281 + $0x10] sm:$0xf]
        %v287 = vld [vmem:[%s281 + $0x14] sm:$0xf]
        %v288 = vld [vmem:[%s281 + $0x18] sm:$0xf]
        %v289 = vld [vmem:[%s281 + $0x1c] sm:$0xf]
        %s290 = scalar_lea.vmem %s1, 2
        %v291 = vld [vmem:[%s290] sm:$0x3]
        %v300 = vunpack.c.l.b16 %v282
        %v301 = vunpack.c.l.b16 %v283
        %v302 = vunpack.c.l.b16 %v284
        %v303 = vunpack.c.l.b16 %v285
        %v304 = vunpack.c.l.b16 %v286
        %v305 = vunpack.c.l.b16 %v287
        %v306 = vunpack.c.l.b16 %v288
        %v307 = vunpack.c.l.b16 %v289
        %v308 = vpack.c.b16 %v301, %v300
        %v309 = vpack.c.b16 %v303, %v302
        %v310 = vpack.c.b16 %v305, %v304
        %v311 = vpack.c.b16 %v307, %v306
        %v313 = vsel %vm226, %v308, 0
        %v316 = vsel %vm226, %v309, 0
        %v319 = vsel %vm226, %v310, 0
        %v322 = vsel %vm226, %v311, 0
        %v325 = vsel %vm239, %v291, 0
        %327 = vmatpush.bf16.msra.mxu0 0
        %328 = vmatpush.bf16.msra.mxu0 0
        %329 = vmatpush.bf16.msra.mxu0 0
        %330 = vmatpush.bf16.msra.mxu0 0
        %331 = vmatpush.bf16.msra.mxu0 0
        %332 = vmatpush.bf16.msra.mxu0 0
        %333 = vmatpush.bf16.msra.mxu0 0
        %334 = vmatpush.bf16.msra.mxu0 %v325
        %335 = vmatmul.bf16.gmra.mxu0 %v313
        %v336 = vpop.f32.mrf.mxu0
        %v337 = vadd.f32 0.0, %v336
        %v338 = vpop.f32.mrf.mxu0
        %v339 = vadd.f32 0.0, %v338
        %340 = vmatmul.bf16.gmra.mxu0 %v316
        %v341 = vpop.f32.mrf.mxu0
        %v342 = vadd.f32 0.0, %v341
        %v343 = vpop.f32.mrf.mxu0
        %v344 = vadd.f32 0.0, %v343
        %345 = vmatmul.bf16.gmra.mxu0 %v319
        %v346 = vpop.f32.mrf.mxu0
        %v347 = vadd.f32 0.0, %v346
        %v348 = vpop.f32.mrf.mxu0
        %v349 = vadd.f32 0.0, %v348
        %350 = vmatmul.bf16.gmra.mxu0 %v322
        %v351 = vpop.f32.mrf.mxu0
        %v352 = vadd.f32 0.0, %v351
        %v353 = vpop.f32.mrf.mxu0
        %v354 = vadd.f32 0.0, %v353
        %355 = vdwg.mxu0
        %v356 = vld [vmem:[#allocation3] sm:$0xff]
        %v357 = vld [vmem:[#allocation3 + $0x8] sm:$0xff]
        %v358 = vld [vmem:[#allocation3 + $0x10] sm:$0xff]
        %v359 = vld [vmem:[#allocation3 + $0x18] sm:$0xff]
        %v360 = vld [vmem:[#allocation3 + $0x20] sm:$0xff]
        %v361 = vld [vmem:[#allocation3 + $0x28] sm:$0xff]
        %v362 = vld [vmem:[#allocation3 + $0x30] sm:$0xff]
        %v363 = vld [vmem:[#allocation3 + $0x38] sm:$0xff]
        %v364 = vadd.f32 %v356, %v337
        %v365 = vadd.f32 %v357, %v339
        %v366 = vadd.f32 %v358, %v342
        %v367 = vadd.f32 %v359, %v344
        %v368 = vadd.f32 %v360, %v347
        %v369 = vadd.f32 %v361, %v349
        %v370 = vadd.f32 %v362, %v352
        %v371 = vadd.f32 %v363, %v354
        %372 = vst.msk [vmem:[#allocation3] sm:$0xff] %vm272, %v364
        %373 = vst.msk [vmem:[#allocation3 + $0x8] sm:$0xff] %vm272, %v365
        %374 = vst.msk [vmem:[#allocation3 + $0x10] sm:$0xff] %vm272, %v366
        %375 = vst.msk [vmem:[#allocation3 + $0x18] sm:$0xff] %vm272, %v367
        %376 = vst.msk [vmem:[#allocation3 + $0x20] sm:$0xff] %vm272, %v368
        %377 = vst.msk [vmem:[#allocation3 + $0x28] sm:$0xff] %vm272, %v369
        %378 = vst.msk [vmem:[#allocation3 + $0x30] sm:$0xff] %vm272, %v370
        %379 = vst.msk [vmem:[#allocation3 + $0x38] sm:$0xff] %vm272, %v371
        %s380 = scalar_lea.vmem %s195, 36
        %v381 = vld [vmem:[%s380] sm:$0xf]
        %v382 = vld [vmem:[%s380 + $0x4] sm:$0xf]
        %v383 = vld [vmem:[%s380 + $0x8] sm:$0xf]
        %v384 = vld [vmem:[%s380 + $0xc] sm:$0xf]
        %v385 = vld [vmem:[%s380 + $0x10] sm:$0xf]
        %v386 = vld [vmem:[%s380 + $0x14] sm:$0xf]
        %v387 = vld [vmem:[%s380 + $0x18] sm:$0xf]
        %v388 = vld [vmem:[%s380 + $0x1c] sm:$0xf]
        %s389 = scalar_lea.vmem %s1, 4
        %v390 = vld [vmem:[%s389] sm:$0x3]
        %v399 = vunpack.c.l.b16 %v381
        %v400 = vunpack.c.l.b16 %v382
        %v401 = vunpack.c.l.b16 %v383
        %v402 = vunpack.c.l.b16 %v384
        %v403 = vunpack.c.l.b16 %v385
        %v404 = vunpack.c.l.b16 %v386
        %v405 = vunpack.c.l.b16 %v387
        %v406 = vunpack.c.l.b16 %v388
        %v407 = vpack.c.b16 %v400, %v399
        %v408 = vpack.c.b16 %v402, %v401
        %v409 = vpack.c.b16 %v404, %v403
        %v410 = vpack.c.b16 %v406, %v405
        %v412 = vsel %vm226, %v407, 0
        %v415 = vsel %vm226, %v408, 0
        %v418 = vsel %vm226, %v409, 0
        %v421 = vsel %vm226, %v410, 0
        %v424 = vsel %vm239, %v390, 0
        %426 = vmatpush.bf16.msra.mxu0 0
        %427 = vmatpush.bf16.msra.mxu0 0
        %428 = vmatpush.bf16.msra.mxu0 0
        %429 = vmatpush.bf16.msra.mxu0 0
        %430 = vmatpush.bf16.msra.mxu0 0
        %431 = vmatpush.bf16.msra.mxu0 0
        %432 = vmatpush.bf16.msra.mxu0 0
        %433 = vmatpush.bf16.msra.mxu0 %v424
        %434 = vmatmul.bf16.gmra.mxu0 %v412
        %v435 = vpop.f32.mrf.mxu0
        %v436 = vadd.f32 0.0, %v435
        %v437 = vpop.f32.mrf.mxu0
        %v438 = vadd.f32 0.0, %v437
        %439 = vmatmul.bf16.gmra.mxu0 %v415
        %v440 = vpop.f32.mrf.mxu0
        %v441 = vadd.f32 0.0, %v440
        %v442 = vpop.f32.mrf.mxu0
        %v443 = vadd.f32 0.0, %v442
        %444 = vmatmul.bf16.gmra.mxu0 %v418
        %v445 = vpop.f32.mrf.mxu0
        %v446 = vadd.f32 0.0, %v445
        %v447 = vpop.f32.mrf.mxu0
        %v448 = vadd.f32 0.0, %v447
        %449 = vmatmul.bf16.gmra.mxu0 %v421
        %v450 = vpop.f32.mrf.mxu0
        %v451 = vadd.f32 0.0, %v450
        %v452 = vpop.f32.mrf.mxu0
        %v453 = vadd.f32 0.0, %v452
        %454 = vdwg.mxu0
        %v455 = vld [vmem:[#allocation3] sm:$0xff]
        %v456 = vld [vmem:[#allocation3 + $0x8] sm:$0xff]
        %v457 = vld [vmem:[#allocation3 + $0x10] sm:$0xff]
        %v458 = vld [vmem:[#allocation3 + $0x18] sm:$0xff]
        %v459 = vld [vmem:[#allocation3 + $0x20] sm:$0xff]
        %v460 = vld [vmem:[#allocation3 + $0x28] sm:$0xff]
        %v461 = vld [vmem:[#allocation3 + $0x30] sm:$0xff]
        %v462 = vld [vmem:[#allocation3 + $0x38] sm:$0xff]
        %v463 = vadd.f32 %v455, %v436
        %v464 = vadd.f32 %v456, %v438
        %v465 = vadd.f32 %v457, %v441
        %v466 = vadd.f32 %v458, %v443
        %v467 = vadd.f32 %v459, %v446
        %v468 = vadd.f32 %v460, %v448
        %v469 = vadd.f32 %v461, %v451
        %v470 = vadd.f32 %v462, %v453
        %471 = vst.msk [vmem:[#allocation3] sm:$0xff] %vm272, %v463
        %472 = vst.msk [vmem:[#allocation3 + $0x8] sm:$0xff] %vm272, %v464
        %473 = vst.msk [vmem:[#allocation3 + $0x10] sm:$0xff] %vm272, %v465
        %474 = vst.msk [vmem:[#allocation3 + $0x18] sm:$0xff] %vm272, %v466
        %475 = vst.msk [vmem:[#allocation3 + $0x20] sm:$0xff] %vm272, %v467
        %476 = vst.msk [vmem:[#allocation3 + $0x28] sm:$0xff] %vm272, %v468
        %477 = vst.msk [vmem:[#allocation3 + $0x30] sm:$0xff] %vm272, %v469
        %478 = vst.msk [vmem:[#allocation3 + $0x38] sm:$0xff] %vm272, %v470
        %s479 = scalar_lea.vmem %s195, 108
        %v480 = vld [vmem:[%s479] sm:$0xf]
        %v481 = vld [vmem:[%s479 + $0x4] sm:$0xf]
        %v482 = vld [vmem:[%s479 + $0x8] sm:$0xf]
        %v483 = vld [vmem:[%s479 + $0xc] sm:$0xf]
        %v484 = vld [vmem:[%s479 + $0x10] sm:$0xf]
        %v485 = vld [vmem:[%s479 + $0x14] sm:$0xf]
        %v486 = vld [vmem:[%s479 + $0x18] sm:$0xf]
        %v487 = vld [vmem:[%s479 + $0x1c] sm:$0xf]
        %s488 = scalar_lea.vmem %s1, 6
        %v489 = vld [vmem:[%s488] sm:$0x3]
        %v498 = vunpack.c.l.b16 %v480
        %v499 = vunpack.c.l.b16 %v481
        %v500 = vunpack.c.l.b16 %v482
        %v501 = vunpack.c.l.b16 %v483
        %v502 = vunpack.c.l.b16 %v484
        %v503 = vunpack.c.l.b16 %v485
        %v504 = vunpack.c.l.b16 %v486
        %v505 = vunpack.c.l.b16 %v487
        %v506 = vpack.c.b16 %v499, %v498
        %v507 = vpack.c.b16 %v501, %v500
        %v508 = vpack.c.b16 %v503, %v502
        %v509 = vpack.c.b16 %v505, %v504
        %v511 = vsel %vm226, %v506, 0
        %v514 = vsel %vm226, %v507, 0
        %v517 = vsel %vm226, %v508, 0
        %v520 = vsel %vm226, %v509, 0
        %v523 = vsel %vm239, %v489, 0
        %525 = vmatpush.bf16.msra.mxu0 0
        %526 = vmatpush.bf16.msra.mxu0 0
        %527 = vmatpush.bf16.msra.mxu0 0
        %528 = vmatpush.bf16.msra.mxu0 0
        %529 = vmatpush.bf16.msra.mxu0 0
        %530 = vmatpush.bf16.msra.mxu0 0
        %531 = vmatpush.bf16.msra.mxu0 0
        %532 = vmatpush.bf16.msra.mxu0 %v523
        %533 = vmatmul.bf16.gmra.mxu0 %v511
        %v534 = vpop.f32.mrf.mxu0
        %v535 = vadd.f32 0.0, %v534
        %v536 = vpop.f32.mrf.mxu0
        %v537 = vadd.f32 0.0, %v536
        %538 = vmatmul.bf16.gmra.mxu0 %v514
        %v539 = vpop.f32.mrf.mxu0
        %v540 = vadd.f32 0.0, %v539
        %v541 = vpop.f32.mrf.mxu0
        %v542 = vadd.f32 0.0, %v541
        %543 = vmatmul.bf16.gmra.mxu0 %v517
        %v544 = vpop.f32.mrf.mxu0
        %v545 = vadd.f32 0.0, %v544
        %v546 = vpop.f32.mrf.mxu0
        %v547 = vadd.f32 0.0, %v546
        %548 = vmatmul.bf16.gmra.mxu0 %v520
        %v549 = vpop.f32.mrf.mxu0
        %v550 = vadd.f32 0.0, %v549
        %v551 = vpop.f32.mrf.mxu0
        %v552 = vadd.f32 0.0, %v551
        %553 = vdwg.mxu0
        %v554 = vld [vmem:[#allocation3] sm:$0xff]
        %v555 = vld [vmem:[#allocation3 + $0x8] sm:$0xff]
        %v556 = vld [vmem:[#allocation3 + $0x10] sm:$0xff]
        %v557 = vld [vmem:[#allocation3 + $0x18] sm:$0xff]
        %v558 = vld [vmem:[#allocation3 + $0x20] sm:$0xff]
        %v559 = vld [vmem:[#allocation3 + $0x28] sm:$0xff]
        %v560 = vld [vmem:[#allocation3 + $0x30] sm:$0xff]
        %v561 = vld [vmem:[#allocation3 + $0x38] sm:$0xff]
        %v562 = vadd.f32 %v554, %v535
        %v563 = vadd.f32 %v555, %v537
        %v564 = vadd.f32 %v556, %v540
        %v565 = vadd.f32 %v557, %v542
        %v566 = vadd.f32 %v558, %v545
        %v567 = vadd.f32 %v559, %v547
        %v568 = vadd.f32 %v560, %v550
        %v569 = vadd.f32 %v561, %v552
        %570 = vst.msk [vmem:[#allocation3] sm:$0xff] %vm272, %v562
        %571 = vst.msk [vmem:[#allocation3 + $0x8] sm:$0xff] %vm272, %v563
        %572 = vst.msk [vmem:[#allocation3 + $0x10] sm:$0xff] %vm272, %v564
        %573 = vst.msk [vmem:[#allocation3 + $0x18] sm:$0xff] %vm272, %v565
        %574 = vst.msk [vmem:[#allocation3 + $0x20] sm:$0xff] %vm272, %v566
        %575 = vst.msk [vmem:[#allocation3 + $0x28] sm:$0xff] %vm272, %v567
        %576 = vst.msk [vmem:[#allocation3 + $0x30] sm:$0xff] %vm272, %v568
        %577 = vst.msk [vmem:[#allocation3 + $0x38] sm:$0xff] %vm272, %v569
        %s578 = scalar_lea.vmem %s195, 180
        %v579 = vld [vmem:[%s578] sm:$0xf]
        %v580 = vld [vmem:[%s578 + $0x4] sm:$0xf]
        %v581 = vld [vmem:[%s578 + $0x8] sm:$0xf]
        %v582 = vld [vmem:[%s578 + $0xc] sm:$0xf]
        %v583 = vld [vmem:[%s578 + $0x10] sm:$0xf]
        %v584 = vld [vmem:[%s578 + $0x14] sm:$0xf]
        %v585 = vld [vmem:[%s578 + $0x18] sm:$0xf]
        %v586 = vld [vmem:[%s578 + $0x1c] sm:$0xf]
        %s587 = scalar_lea.vmem %s1, 8
        %v588 = vld [vmem:[%s587] sm:$0x3]
        %v597 = vunpack.c.l.b16 %v579
        %v598 = vunpack.c.l.b16 %v580
        %v599 = vunpack.c.l.b16 %v581
        %v600 = vunpack.c.l.b16 %v582
        %v601 = vunpack.c.l.b16 %v583
        %v602 = vunpack.c.l.b16 %v584
        %v603 = vunpack.c.l.b16 %v585
        %v604 = vunpack.c.l.b16 %v586
        %v605 = vpack.c.b16 %v598, %v597
        %v606 = vpack.c.b16 %v600, %v599
        %v607 = vpack.c.b16 %v602, %v601
        %v608 = vpack.c.b16 %v604, %v603
        %v610 = vsel %vm226, %v605, 0
        %v613 = vsel %vm226, %v606, 0
        %v616 = vsel %vm226, %v607, 0
        %v619 = vsel %vm226, %v608, 0
        %v622 = vsel %vm239, %v588, 0
        %624 = vmatpush.bf16.msra.mxu0 0
        %625 = vmatpush.bf16.msra.mxu0 0
        %626 = vmatpush.bf16.msra.mxu0 0
        %627 = vmatpush.bf16.msra.mxu0 0
        %628 = vmatpush.bf16.msra.mxu0 0
        %629 = vmatpush.bf16.msra.mxu0 0
        %630 = vmatpush.bf16.msra.mxu0 0
        %631 = vmatpush.bf16.msra.mxu0 %v622
        %632 = vmatmul.bf16.gmra.mxu0 %v610
        %v633 = vpop.f32.mrf.mxu0
        %v634 = vadd.f32 0.0, %v633
        %v635 = vpop.f32.mrf.mxu0
        %v636 = vadd.f32 0.0, %v635
        %637 = vmatmul.bf16.gmra.mxu0 %v613
        %v638 = vpop.f32.mrf.mxu0
        %v639 = vadd.f32 0.0, %v638
        %v640 = vpop.f32.mrf.mxu0
        %v641 = vadd.f32 0.0, %v640
        %642 = vmatmul.bf16.gmra.mxu0 %v616
        %v643 = vpop.f32.mrf.mxu0
        %v644 = vadd.f32 0.0, %v643
        %v645 = vpop.f32.mrf.mxu0
        %v646 = vadd.f32 0.0, %v645
        %647 = vmatmul.bf16.gmra.mxu0 %v619
        %v648 = vpop.f32.mrf.mxu0
        %v649 = vadd.f32 0.0, %v648
        %v650 = vpop.f32.mrf.mxu0
        %v651 = vadd.f32 0.0, %v650
        %652 = vdwg.mxu0
        %v653 = vld [vmem:[#allocation3] sm:$0xff]
        %v654 = vld [vmem:[#allocation3 + $0x8] sm:$0xff]
        %v655 = vld [vmem:[#allocation3 + $0x10] sm:$0xff]
        %v656 = vld [vmem:[#allocation3 + $0x18] sm:$0xff]
        %v657 = vld [vmem:[#allocation3 + $0x20] sm:$0xff]
        %v658 = vld [vmem:[#allocation3 + $0x28] sm:$0xff]
        %v659 = vld [vmem:[#allocation3 + $0x30] sm:$0xff]
        %v660 = vld [vmem:[#allocation3 + $0x38] sm:$0xff]
        %v661 = vadd.f32 %v653, %v634
        %v662 = vadd.f32 %v654, %v636
        %v663 = vadd.f32 %v655, %v639
        %v664 = vadd.f32 %v656, %v641
        %v665 = vadd.f32 %v657, %v644
        %v666 = vadd.f32 %v658, %v646
        %v667 = vadd.f32 %v659, %v649
        %v668 = vadd.f32 %v660, %v651
        %669 = vst.msk [vmem:[#allocation3] sm:$0xff] %vm272, %v661
        %670 = vst.msk [vmem:[#allocation3 + $0x8] sm:$0xff] %vm272, %v662
        %671 = vst.msk [vmem:[#allocation3 + $0x10] sm:$0xff] %vm272, %v663
        %672 = vst.msk [vmem:[#allocation3 + $0x18] sm:$0xff] %vm272, %v664
        %673 = vst.msk [vmem:[#allocation3 + $0x20] sm:$0xff] %vm272, %v665
        %674 = vst.msk [vmem:[#allocation3 + $0x28] sm:$0xff] %vm272, %v666
        %675 = vst.msk [vmem:[#allocation3 + $0x30] sm:$0xff] %vm272, %v667
        %676 = vst.msk [vmem:[#allocation3 + $0x38] sm:$0xff] %vm272, %v668
        %v677 = vld [vmem:[%s3] sm:$0x3]
        %v679 = vsel %vm239, %v677, 0
        %681 = vmatpush.bf16.msra.mxu0 0
        %682 = vmatpush.bf16.msra.mxu0 0
        %683 = vmatpush.bf16.msra.mxu0 0
        %684 = vmatpush.bf16.msra.mxu0 0
        %685 = vmatpush.bf16.msra.mxu0 0
        %686 = vmatpush.bf16.msra.mxu0 0
        %687 = vmatpush.bf16.msra.mxu0 0
        %688 = vmatpush.bf16.msra.mxu0 %v679
        %689 = vmatmul.bf16.gmra.mxu0 %v610
        %v690 = vpop.f32.mrf.mxu0
        %v691 = vadd.f32 0.0, %v690
        %v692 = vpop.f32.mrf.mxu0
        %v693 = vadd.f32 0.0, %v692
        %694 = vmatmul.bf16.gmra.mxu0 %v613
        %v695 = vpop.f32.mrf.mxu0
        %v696 = vadd.f32 0.0, %v695
        %v697 = vpop.f32.mrf.mxu0
        %v698 = vadd.f32 0.0, %v697
        %699 = vmatmul.bf16.gmra.mxu0 %v616
        %v700 = vpop.f32.mrf.mxu0
        %v701 = vadd.f32 0.0, %v700
        %v702 = vpop.f32.mrf.mxu0
        %v703 = vadd.f32 0.0, %v702
        %704 = vmatmul.bf16.gmra.mxu0 %v619
        %v705 = vpop.f32.mrf.mxu0
        %v706 = vadd.f32 0.0, %v705
        %v707 = vpop.f32.mrf.mxu0
        %v708 = vadd.f32 0.0, %v707
        %709 = vdwg.mxu0
        %s710 = scalar_lea.vmem %s195, 144
        %v711 = vld [vmem:[%s710] sm:$0xf]
        %v712 = vld [vmem:[%s710 + $0x4] sm:$0xf]
        %v713 = vld [vmem:[%s710 + $0x8] sm:$0xf]
        %v714 = vld [vmem:[%s710 + $0xc] sm:$0xf]
        %v715 = vld [vmem:[%s710 + $0x10] sm:$0xf]
        %v716 = vld [vmem:[%s710 + $0x14] sm:$0xf]
        %v717 = vld [vmem:[%s710 + $0x18] sm:$0xf]
        %v718 = vld [vmem:[%s710 + $0x1c] sm:$0xf]
        %s719 = scalar_lea.vmem %s1, 10
        %v720 = vld [vmem:[%s719] sm:$0x3]
        %v729 = vunpack.c.l.b16 %v711
        %v730 = vunpack.c.l.b16 %v712
        %v731 = vunpack.c.l.b16 %v713
        %v732 = vunpack.c.l.b16 %v714
        %v733 = vunpack.c.l.b16 %v715
        %v734 = vunpack.c.l.b16 %v716
        %v735 = vunpack.c.l.b16 %v717
        %v736 = vunpack.c.l.b16 %v718
        %v737 = vpack.c.b16 %v730, %v729
        %v738 = vpack.c.b16 %v732, %v731
        %v739 = vpack.c.b16 %v734, %v733
        %v740 = vpack.c.b16 %v736, %v735
        %v742 = vsel %vm226, %v737, 0
        %v745 = vsel %vm226, %v738, 0
        %v748 = vsel %vm226, %v739, 0
        %v751 = vsel %vm226, %v740, 0
        %v754 = vsel %vm239, %v720, 0
        %756 = vmatpush.bf16.msra.mxu0 0
        %757 = vmatpush.bf16.msra.mxu0 0
        %758 = vmatpush.bf16.msra.mxu0 0
        %759 = vmatpush.bf16.msra.mxu0 0
        %760 = vmatpush.bf16.msra.mxu0 0
        %761 = vmatpush.bf16.msra.mxu0 0
        %762 = vmatpush.bf16.msra.mxu0 0
        %763 = vmatpush.bf16.msra.mxu0 %v754
        %764 = vmatmul.bf16.gmra.mxu0 %v742
        %v765 = vpop.f32.mrf.mxu0
        %v766 = vadd.f32 0.0, %v765
        %v767 = vpop.f32.mrf.mxu0
        %v768 = vadd.f32 0.0, %v767
        %769 = vmatmul.bf16.gmra.mxu0 %v745
        %v770 = vpop.f32.mrf.mxu0
        %v771 = vadd.f32 0.0, %v770
        %v772 = vpop.f32.mrf.mxu0
        %v773 = vadd.f32 0.0, %v772
        %774 = vmatmul.bf16.gmra.mxu0 %v748
        %v775 = vpop.f32.mrf.mxu0
        %v776 = vadd.f32 0.0, %v775
        %v777 = vpop.f32.mrf.mxu0
        %v778 = vadd.f32 0.0, %v777
        %779 = vmatmul.bf16.gmra.mxu0 %v751
        %v780 = vpop.f32.mrf.mxu0
        %v781 = vadd.f32 0.0, %v780
        %v782 = vpop.f32.mrf.mxu0
        %v783 = vadd.f32 0.0, %v782
        %784 = vdwg.mxu0
        %v785 = vld [vmem:[#allocation3] sm:$0xff]
        %v786 = vld [vmem:[#allocation3 + $0x8] sm:$0xff]
        %v787 = vld [vmem:[#allocation3 + $0x10] sm:$0xff]
        %v788 = vld [vmem:[#allocation3 + $0x18] sm:$0xff]
        %v789 = vld [vmem:[#allocation3 + $0x20] sm:$0xff]
        %v790 = vld [vmem:[#allocation3 + $0x28] sm:$0xff]
        %v791 = vld [vmem:[#allocation3 + $0x30] sm:$0xff]
        %v792 = vld [vmem:[#allocation3 + $0x38] sm:$0xff]
        %v793 = vadd.f32 %v785, %v766
        %v794 = vadd.f32 %v786, %v768
        %v795 = vadd.f32 %v787, %v771
        %v796 = vadd.f32 %v788, %v773
        %v797 = vadd.f32 %v789, %v776
        %v798 = vadd.f32 %v790, %v778
        %v799 = vadd.f32 %v791, %v781
        %v800 = vadd.f32 %v792, %v783
        %801 = vst.msk [vmem:[#allocation3] sm:$0xff] %vm272, %v793
        %802 = vst.msk [vmem:[#allocation3 + $0x8] sm:$0xff] %vm272, %v794
        %803 = vst.msk [vmem:[#allocation3 + $0x10] sm:$0xff] %vm272, %v795
        %804 = vst.msk [vmem:[#allocation3 + $0x18] sm:$0xff] %vm272, %v796
        %805 = vst.msk [vmem:[#allocation3 + $0x20] sm:$0xff] %vm272, %v797
        %806 = vst.msk [vmem:[#allocation3 + $0x28] sm:$0xff] %vm272, %v798
        %807 = vst.msk [vmem:[#allocation3 + $0x30] sm:$0xff] %vm272, %v799
        %808 = vst.msk [vmem:[#allocation3 + $0x38] sm:$0xff] %vm272, %v800
        %s809 = scalar_lea.vmem %s195, 4
        %v810 = vld [vmem:[%s809] sm:$0xf]
        %v811 = vld [vmem:[%s809 + $0x4] sm:$0xf]
        %v812 = vld [vmem:[%s809 + $0x8] sm:$0xf]
        %v813 = vld [vmem:[%s809 + $0xc] sm:$0xf]
        %v814 = vld [vmem:[%s809 + $0x10] sm:$0xf]
        %v815 = vld [vmem:[%s809 + $0x14] sm:$0xf]
        %v816 = vld [vmem:[%s809 + $0x18] sm:$0xf]
        %v817 = vld [vmem:[%s809 + $0x1c] sm:$0xf]
        %s818 = scalar_lea.vmem %s1, 12
        %v819 = vld [vmem:[%s818] sm:$0x3]
        %v828 = vunpack.c.l.b16 %v810
        %v829 = vunpack.c.l.b16 %v811
        %v830 = vunpack.c.l.b16 %v812
        %v831 = vunpack.c.l.b16 %v813
        %v832 = vunpack.c.l.b16 %v814
        %v833 = vunpack.c.l.b16 %v815
        %v834 = vunpack.c.l.b16 %v816
        %v835 = vunpack.c.l.b16 %v817
        %v836 = vpack.c.b16 %v829, %v828
        %v837 = vpack.c.b16 %v831, %v830
        %v838 = vpack.c.b16 %v833, %v832
        %v839 = vpack.c.b16 %v835, %v834
        %v841 = vsel %vm226, %v836, 0
        %v844 = vsel %vm226, %v837, 0
        %v847 = vsel %vm226, %v838, 0
        %v850 = vsel %vm226, %v839, 0
        %v853 = vsel %vm239, %v819, 0
        %855 = vmatpush.bf16.msra.mxu0 0
        %856 = vmatpush.bf16.msra.mxu0 0
        %857 = vmatpush.bf16.msra.mxu0 0
        %858 = vmatpush.bf16.msra.mxu0 0
        %859 = vmatpush.bf16.msra.mxu0 0
        %860 = vmatpush.bf16.msra.mxu0 0
        %861 = vmatpush.bf16.msra.mxu0 0
        %862 = vmatpush.bf16.msra.mxu0 %v853
        %863 = vmatmul.bf16.gmra.mxu0 %v841
        %v864 = vpop.f32.mrf.mxu0
        %v865 = vadd.f32 0.0, %v864
        %v866 = vpop.f32.mrf.mxu0
        %v867 = vadd.f32 0.0, %v866
        %868 = vmatmul.bf16.gmra.mxu0 %v844
        %v869 = vpop.f32.mrf.mxu0
        %v870 = vadd.f32 0.0, %v869
        %v871 = vpop.f32.mrf.mxu0
        %v872 = vadd.f32 0.0, %v871
        %873 = vmatmul.bf16.gmra.mxu0 %v847
        %v874 = vpop.f32.mrf.mxu0
        %v875 = vadd.f32 0.0, %v874
        %v876 = vpop.f32.mrf.mxu0
        %v877 = vadd.f32 0.0, %v876
        %878 = vmatmul.bf16.gmra.mxu0 %v850
        %v879 = vpop.f32.mrf.mxu0
        %v880 = vadd.f32 0.0, %v879
        %v881 = vpop.f32.mrf.mxu0
        %v882 = vadd.f32 0.0, %v881
        %883 = vdwg.mxu0
        %v884 = vld [vmem:[#allocation3] sm:$0xff]
        %v885 = vld [vmem:[#allocation3 + $0x8] sm:$0xff]
        %v886 = vld [vmem:[#allocation3 + $0x10] sm:$0xff]
        %v887 = vld [vmem:[#allocation3 + $0x18] sm:$0xff]
        %v888 = vld [vmem:[#allocation3 + $0x20] sm:$0xff]
        %v889 = vld [vmem:[#allocation3 + $0x28] sm:$0xff]
        %v890 = vld [vmem:[#allocation3 + $0x30] sm:$0xff]
        %v891 = vld [vmem:[#allocation3 + $0x38] sm:$0xff]
        %v892 = vadd.f32 %v884, %v865
        %v893 = vadd.f32 %v885, %v867
        %v894 = vadd.f32 %v886, %v870
        %v895 = vadd.f32 %v887, %v872
        %v896 = vadd.f32 %v888, %v875
        %v897 = vadd.f32 %v889, %v877
        %v898 = vadd.f32 %v890, %v880
        %v899 = vadd.f32 %v891, %v882
        %900 = vst.msk [vmem:[#allocation3] sm:$0xff] %vm272, %v892
        %901 = vst.msk [vmem:[#allocation3 + $0x8] sm:$0xff] %vm272, %v893
        %902 = vst.msk [vmem:[#allocation3 + $0x10] sm:$0xff] %vm272, %v894
        %903 = vst.msk [vmem:[#allocation3 + $0x18] sm:$0xff] %vm272, %v895
        %904 = vst.msk [vmem:[#allocation3 + $0x20] sm:$0xff] %vm272, %v896
        %905 = vst.msk [vmem:[#allocation3 + $0x28] sm:$0xff] %vm272, %v897
        %906 = vst.msk [vmem:[#allocation3 + $0x30] sm:$0xff] %vm272, %v898
        %907 = vst.msk [vmem:[#allocation3 + $0x38] sm:$0xff] %vm272, %v899
        %s908 = scalar_lea.vmem %s195, 76
        %v909 = vld [vmem:[%s908] sm:$0xf]
        %v910 = vld [vmem:[%s908 + $0x4] sm:$0xf]
        %v911 = vld [vmem:[%s908 + $0x8] sm:$0xf]
        %v912 = vld [vmem:[%s908 + $0xc] sm:$0xf]
        %v913 = vld [vmem:[%s908 + $0x10] sm:$0xf]
        %v914 = vld [vmem:[%s908 + $0x14] sm:$0xf]
        %v915 = vld [vmem:[%s908 + $0x18] sm:$0xf]
        %v916 = vld [vmem:[%s908 + $0x1c] sm:$0xf]
        %s917 = scalar_lea.vmem %s1, 14
        %v918 = vld [vmem:[%s917] sm:$0x3]
        %v927 = vunpack.c.l.b16 %v909
        %v928 = vunpack.c.l.b16 %v910
        %v929 = vunpack.c.l.b16 %v911
        %v930 = vunpack.c.l.b16 %v912
        %v931 = vunpack.c.l.b16 %v913
        %v932 = vunpack.c.l.b16 %v914
        %v933 = vunpack.c.l.b16 %v915
        %v934 = vunpack.c.l.b16 %v916
        %v935 = vpack.c.b16 %v928, %v927
        %v936 = vpack.c.b16 %v930, %v929
        %v937 = vpack.c.b16 %v932, %v931
        %v938 = vpack.c.b16 %v934, %v933
        %v940 = vsel %vm226, %v935, 0
        %v943 = vsel %vm226, %v936, 0
        %v946 = vsel %vm226, %v937, 0
        %v949 = vsel %vm226, %v938, 0
        %v952 = vsel %vm239, %v918, 0
        %954 = vmatpush.bf16.msra.mxu0 0
        %955 = vmatpush.bf16.msra.mxu0 0
        %956 = vmatpush.bf16.msra.mxu0 0
        %957 = vmatpush.bf16.msra.mxu0 0
        %958 = vmatpush.bf16.msra.mxu0 0
        %959 = vmatpush.bf16.msra.mxu0 0
        %960 = vmatpush.bf16.msra.mxu0 0
        %961 = vmatpush.bf16.msra.mxu0 %v952
        %962 = vmatmul.bf16.gmra.mxu0 %v940
        %v963 = vpop.f32.mrf.mxu0
        %v964 = vadd.f32 0.0, %v963
        %v965 = vpop.f32.mrf.mxu0
        %v966 = vadd.f32 0.0, %v965
        %967 = vmatmul.bf16.gmra.mxu0 %v943
        %v968 = vpop.f32.mrf.mxu0
        %v969 = vadd.f32 0.0, %v968
        %v970 = vpop.f32.mrf.mxu0
        %v971 = vadd.f32 0.0, %v970
        %972 = vmatmul.bf16.gmra.mxu0 %v946
        %v973 = vpop.f32.mrf.mxu0
        %v974 = vadd.f32 0.0, %v973
        %v975 = vpop.f32.mrf.mxu0
        %v976 = vadd.f32 0.0, %v975
        %977 = vmatmul.bf16.gmra.mxu0 %v949
        %v978 = vpop.f32.mrf.mxu0
        %v979 = vadd.f32 0.0, %v978
        %v980 = vpop.f32.mrf.mxu0
        %v981 = vadd.f32 0.0, %v980
        %982 = vdwg.mxu0
        %v983 = vld [vmem:[#allocation3] sm:$0xff]
        %v984 = vld [vmem:[#allocation3 + $0x8] sm:$0xff]
        %v985 = vld [vmem:[#allocation3 + $0x10] sm:$0xff]
        %v986 = vld [vmem:[#allocation3 + $0x18] sm:$0xff]
        %v987 = vld [vmem:[#allocation3 + $0x20] sm:$0xff]
        %v988 = vld [vmem:[#allocation3 + $0x28] sm:$0xff]
        %v989 = vld [vmem:[#allocation3 + $0x30] sm:$0xff]
        %v990 = vld [vmem:[#allocation3 + $0x38] sm:$0xff]
        %v991 = vadd.f32 %v983, %v964
        %v992 = vadd.f32 %v984, %v966
        %v993 = vadd.f32 %v985, %v969
        %v994 = vadd.f32 %v986, %v971
        %v995 = vadd.f32 %v987, %v974
        %v996 = vadd.f32 %v988, %v976
        %v997 = vadd.f32 %v989, %v979
        %v998 = vadd.f32 %v990, %v981
        %999 = vst.msk [vmem:[#allocation3] sm:$0xff] %vm272, %v991
        %1000 = vst.msk [vmem:[#allocation3 + $0x8] sm:$0xff] %vm272, %v992
        %1001 = vst.msk [vmem:[#allocation3 + $0x10] sm:$0xff] %vm272, %v993
        %1002 = vst.msk [vmem:[#allocation3 + $0x18] sm:$0xff] %vm272, %v994
        %1003 = vst.msk [vmem:[#allocation3 + $0x20] sm:$0xff] %vm272, %v995
        %1004 = vst.msk [vmem:[#allocation3 + $0x28] sm:$0xff] %vm272, %v996
        %1005 = vst.msk [vmem:[#allocation3 + $0x30] sm:$0xff] %vm272, %v997
        %1006 = vst.msk [vmem:[#allocation3 + $0x38] sm:$0xff] %vm272, %v998
        %s1007 = scalar_lea.vmem %s195, 40
        %v1008 = vld [vmem:[%s1007] sm:$0xf]
        %v1009 = vld [vmem:[%s1007 + $0x4] sm:$0xf]
        %v1010 = vld [vmem:[%s1007 + $0x8] sm:$0xf]
        %v1011 = vld [vmem:[%s1007 + $0xc] sm:$0xf]
        %v1012 = vld [vmem:[%s1007 + $0x10] sm:$0xf]
        %v1013 = vld [vmem:[%s1007 + $0x14] sm:$0xf]
        %v1014 = vld [vmem:[%s1007 + $0x18] sm:$0xf]
        %v1015 = vld [vmem:[%s1007 + $0x1c] sm:$0xf]
        %s1016 = scalar_lea.vmem %s1, 16
        %v1017 = vld [vmem:[%s1016] sm:$0x3]
        %v1026 = vunpack.c.l.b16 %v1008
        %v1027 = vunpack.c.l.b16 %v1009
        %v1028 = vunpack.c.l.b16 %v1010
        %v1029 = vunpack.c.l.b16 %v1011
        %v1030 = vunpack.c.l.b16 %v1012
        %v1031 = vunpack.c.l.b16 %v1013
        %v1032 = vunpack.c.l.b16 %v1014
        %v1033 = vunpack.c.l.b16 %v1015
        %v1034 = vpack.c.b16 %v1027, %v1026
        %v1035 = vpack.c.b16 %v1029, %v1028
        %v1036 = vpack.c.b16 %v1031, %v1030
        %v1037 = vpack.c.b16 %v1033, %v1032
        %v1039 = vsel %vm226, %v1034, 0
        %v1042 = vsel %vm226, %v1035, 0
        %v1045 = vsel %vm226, %v1036, 0
        %v1048 = vsel %vm226, %v1037, 0
        %v1051 = vsel %vm239, %v1017, 0
        %1053 = vmatpush.bf16.msra.mxu0 0
        %1054 = vmatpush.bf16.msra.mxu0 0
        %1055 = vmatpush.bf16.msra.mxu0 0
        %1056 = vmatpush.bf16.msra.mxu0 0
        %1057 = vmatpush.bf16.msra.mxu0 0
        %1058 = vmatpush.bf16.msra.mxu0 0
        %1059 = vmatpush.bf16.msra.mxu0 0
        %1060 = vmatpush.bf16.msra.mxu0 %v1051
        %1061 = vmatmul.bf16.gmra.mxu0 %v1039
        %v1062 = vpop.f32.mrf.mxu0
        %v1063 = vadd.f32 0.0, %v1062
        %v1064 = vpop.f32.mrf.mxu0
        %v1065 = vadd.f32 0.0, %v1064
        %1066 = vmatmul.bf16.gmra.mxu0 %v1042
        %v1067 = vpop.f32.mrf.mxu0
        %v1068 = vadd.f32 0.0, %v1067
        %v1069 = vpop.f32.mrf.mxu0
        %v1070 = vadd.f32 0.0, %v1069
        %1071 = vmatmul.bf16.gmra.mxu0 %v1045
        %v1072 = vpop.f32.mrf.mxu0
        %v1073 = vadd.f32 0.0, %v1072
        %v1074 = vpop.f32.mrf.mxu0
        %v1075 = vadd.f32 0.0, %v1074
        %1076 = vmatmul.bf16.gmra.mxu0 %v1048
        %v1077 = vpop.f32.mrf.mxu0
        %v1078 = vadd.f32 0.0, %v1077
        %v1079 = vpop.f32.mrf.mxu0
        %v1080 = vadd.f32 0.0, %v1079
        %1081 = vdwg.mxu0
        %v1082 = vld [vmem:[#allocation3] sm:$0xff]
        %v1083 = vld [vmem:[#allocation3 + $0x8] sm:$0xff]
        %v1084 = vld [vmem:[#allocation3 + $0x10] sm:$0xff]
        %v1085 = vld [vmem:[#allocation3 + $0x18] sm:$0xff]
        %v1086 = vld [vmem:[#allocation3 + $0x20] sm:$0xff]
        %v1087 = vld [vmem:[#allocation3 + $0x28] sm:$0xff]
        %v1088 = vld [vmem:[#allocation3 + $0x30] sm:$0xff]
        %v1089 = vld [vmem:[#allocation3 + $0x38] sm:$0xff]
        %v1090 = vadd.f32 %v1082, %v1063
        %v1091 = vadd.f32 %v1083, %v1065
        %v1092 = vadd.f32 %v1084, %v1068
        %v1093 = vadd.f32 %v1085, %v1070
        %v1094 = vadd.f32 %v1086, %v1073
        %v1095 = vadd.f32 %v1087, %v1075
        %v1096 = vadd.f32 %v1088, %v1078
        %v1097 = vadd.f32 %v1089, %v1080
        %1098 = vst.msk [vmem:[#allocation3] sm:$0xff] %vm272, %v1090
        %1099 = vst.msk [vmem:[#allocation3 + $0x8] sm:$0xff] %vm272, %v1091
        %1100 = vst.msk [vmem:[#allocation3 + $0x10] sm:$0xff] %vm272, %v1092
        %1101 = vst.msk [vmem:[#allocation3 + $0x18] sm:$0xff] %vm272, %v1093
        %1102 = vst.msk [vmem:[#allocation3 + $0x20] sm:$0xff] %vm272, %v1094
        %1103 = vst.msk [vmem:[#allocation3 + $0x28] sm:$0xff] %vm272, %v1095
        %1104 = vst.msk [vmem:[#allocation3 + $0x30] sm:$0xff] %vm272, %v1096
        %1105 = vst.msk [vmem:[#allocation3 + $0x38] sm:$0xff] %vm272, %v1097
        %v1106 = vsel %vm272, %v691, 0.0
        %v1107 = vsel %vm272, %v693, 0.0
        %v1108 = vadd.f32 %v1106, %v1107
        %v1109 = vsel %vm272, %v696, 0.0
        %v1110 = vadd.f32 %v1108, %v1109
        %v1111 = vsel %vm272, %v698, 0.0
        %v1112 = vadd.f32 %v1110, %v1111
        %v1113 = vsel %vm272, %v701, 0.0
        %v1114 = vadd.f32 %v1112, %v1113
        %v1115 = vsel %vm272, %v703, 0.0
        %v1116 = vadd.f32 %v1114, %v1115
        %v1117 = vsel %vm272, %v706, 0.0
        %v1118 = vadd.f32 %v1116, %v1117
        %v1119 = vsel %vm272, %v708, 0.0
        %v1120 = vadd.f32 %v1118, %v1119
        %v1121 = vrot.slane %v1120, 4
        %v1122 = vadd.f32 %v1120, %v1121
        %v1123 = vrot.slane %v1122, 2
        %v1124 = vadd.f32 %v1122, %v1123
        %v1125 = vrot.slane %v1124, 1
        %v1126 = vadd.f32 %v1124, %v1125
        %v1127 = vrcp.pop 64.0
        %v1128 = vmul.f32 64.0, %v1127
        %v1129 = vsub.f32 1.0, %v1128
        %v1130 = vmul.f32 %v1127, %v1129
        %v1131 = vadd.f32 %v1127, %v1130
        %vm1132 = vweird.f32 %v1127
        %v1133 = vsel %vm1132, %v1127, %v1131
        %v1134 = vmul.f32 %v1126, %v1133
        %v1135 = vmul.f32 %v691, %v691
        %v1136 = vmul.f32 %v693, %v693
        %v1137 = vmul.f32 %v696, %v696
        %v1138 = vmul.f32 %v698, %v698
        %v1139 = vmul.f32 %v701, %v701
        %v1140 = vmul.f32 %v703, %v703
        %v1141 = vmul.f32 %v706, %v706
        %v1142 = vmul.f32 %v708, %v708
        %v1143 = vsel %vm272, %v1135, 0.0
        %v1144 = vsel %vm272, %v1136, 0.0
        %v1145 = vadd.f32 %v1143, %v1144
        %v1146 = vsel %vm272, %v1137, 0.0
        %v1147 = vadd.f32 %v1145, %v1146
        %v1148 = vsel %vm272, %v1138, 0.0
        %v1149 = vadd.f32 %v1147, %v1148
        %v1150 = vsel %vm272, %v1139, 0.0
        %v1151 = vadd.f32 %v1149, %v1150
        %v1152 = vsel %vm272, %v1140, 0.0
        %v1153 = vadd.f32 %v1151, %v1152
        %v1154 = vsel %vm272, %v1141, 0.0
        %v1155 = vadd.f32 %v1153, %v1154
        %v1156 = vsel %vm272, %v1142, 0.0
        %v1157 = vadd.f32 %v1155, %v1156
        %v1158 = vrot.slane %v1157, 4
        %v1159 = vadd.f32 %v1157, %v1158
        %v1160 = vrot.slane %v1159, 2
        %v1161 = vadd.f32 %v1159, %v1160
        %v1162 = vrot.slane %v1161, 1
        %v1163 = vadd.f32 %v1161, %v1162
        %v1164 = vmul.f32 %v1163, %v1133
        %v1165 = vmul.f32 %v1134, %v1134
        %v1166 = vsub.f32 %v1164, %v1165
        %v1167 = vmax.f32 %v1166, 0.0
        %v1168 = vsub.f32 %v691, %v1134
        %v1169 = vsub.f32 %v693, %v1134
        %v1170 = vsub.f32 %v696, %v1134
        %v1171 = vsub.f32 %v698, %v1134
        %v1172 = vsub.f32 %v701, %v1134
        %v1173 = vsub.f32 %v703, %v1134
        %v1174 = vsub.f32 %v706, %v1134
        %v1175 = vsub.f32 %v708, %v1134
        %v1176 = vadd.f32 %v1167, 1e-05
        %v1177 = vrsqrt.pop %v1176
        %v1178 = vmul.f32 %v1177, %v1176
        %v1179 = vmul.f32 %v1178, %v1177
        %v1180 = vmul.f32 0.5, %v1179
        %v1181 = vsub.f32 1.5, %v1180
        %v1182 = vmul.f32 %v1177, %v1181
        %vm1183 = vweird.f32 %v1176
        %vm1184 = vweird.f32 %v1177
        %vm1185 = vmor %vm1183, %vm1184
        %v1186 = vsel %vm1185, %v1177, %v1182
        %v1187 = vmul.f32 %v1168, %v1186
        %v1188 = vmul.f32 %v1169, %v1186
        %v1189 = vmul.f32 %v1170, %v1186
        %v1190 = vmul.f32 %v1171, %v1186
        %v1191 = vmul.f32 %v1172, %v1186
        %v1192 = vmul.f32 %v1173, %v1186
        %v1193 = vmul.f32 %v1174, %v1186
        %v1194 = vmul.f32 %v1175, %v1186
        %v1195 = vld [vmem:[#allocation3] sm:$0xff]
        %v1196 = vld [vmem:[#allocation3 + $0x8] sm:$0xff]
        %v1197 = vld [vmem:[#allocation3 + $0x10] sm:$0xff]
        %v1198 = vld [vmem:[#allocation3 + $0x18] sm:$0xff]
        %v1199 = vld [vmem:[#allocation3 + $0x20] sm:$0xff]
        %v1200 = vld [vmem:[#allocation3 + $0x28] sm:$0xff]
        %v1201 = vld [vmem:[#allocation3 + $0x30] sm:$0xff]
        %v1202 = vld [vmem:[#allocation3 + $0x38] sm:$0xff]
        %v1203 = vsel %vm272, %v1195, 0.0
        %v1204 = vsel %vm272, %v1196, 0.0
        %v1205 = vadd.f32 %v1203, %v1204
        %v1206 = vsel %vm272, %v1197, 0.0
        %v1207 = vadd.f32 %v1205, %v1206
        %v1208 = vsel %vm272, %v1198, 0.0
        %v1209 = vadd.f32 %v1207, %v1208
        %v1210 = vsel %vm272, %v1199, 0.0
        %v1211 = vadd.f32 %v1209, %v1210
        %v1212 = vsel %vm272, %v1200, 0.0
        %v1213 = vadd.f32 %v1211, %v1212
        %v1214 = vsel %vm272, %v1201, 0.0
        %v1215 = vadd.f32 %v1213, %v1214
        %v1216 = vsel %vm272, %v1202, 0.0
        %v1217 = vadd.f32 %v1215, %v1216
        %v1218 = vrot.slane %v1217, 4
        %v1219 = vadd.f32 %v1217, %v1218
        %v1220 = vrot.slane %v1219, 2
        %v1221 = vadd.f32 %v1219, %v1220
        %v1222 = vrot.slane %v1221, 1
        %v1223 = vadd.f32 %v1221, %v1222
        %v1224 = vmul.f32 %v1223, %v1133
        %v1225 = vmul.f32 %v1195, %v1195
        %v1226 = vmul.f32 %v1196, %v1196
        %v1227 = vmul.f32 %v1197, %v1197
        %v1228 = vmul.f32 %v1198, %v1198
        %v1229 = vmul.f32 %v1199, %v1199
        %v1230 = vmul.f32 %v1200, %v1200
        %v1231 = vmul.f32 %v1201, %v1201
        %v1232 = vmul.f32 %v1202, %v1202
        %v1233 = vsel %vm272, %v1225, 0.0
        %v1234 = vsel %vm272, %v1226, 0.0
        %v1235 = vadd.f32 %v1233, %v1234
        %v1236 = vsel %vm272, %v1227, 0.0
        %v1237 = vadd.f32 %v1235, %v1236
        %v1238 = vsel %vm272, %v1228, 0.0
        %v1239 = vadd.f32 %v1237, %v1238
        %v1240 = vsel %vm272, %v1229, 0.0
        %v1241 = vadd.f32 %v1239, %v1240
        %v1242 = vsel %vm272, %v1230, 0.0
        %v1243 = vadd.f32 %v1241, %v1242
        %v1244 = vsel %vm272, %v1231, 0.0
        %v1245 = vadd.f32 %v1243, %v1244
        %v1246 = vsel %vm272, %v1232, 0.0
        %v1247 = vadd.f32 %v1245, %v1246
        %v1248 = vrot.slane %v1247, 4
        %v1249 = vadd.f32 %v1247, %v1248
        %v1250 = vrot.slane %v1249, 2
        %v1251 = vadd.f32 %v1249, %v1250
        %v1252 = vrot.slane %v1251, 1
        %v1253 = vadd.f32 %v1251, %v1252
        %v1254 = vmul.f32 %v1253, %v1133
        %v1255 = vmul.f32 %v1224, %v1224
        %v1256 = vsub.f32 %v1254, %v1255
        %v1257 = vmax.f32 %v1256, 0.0
        %v1258 = vsub.f32 %v1195, %v1224
        %v1259 = vsub.f32 %v1196, %v1224
        %v1260 = vsub.f32 %v1197, %v1224
        %v1261 = vsub.f32 %v1198, %v1224
        %v1262 = vsub.f32 %v1199, %v1224
        %v1263 = vsub.f32 %v1200, %v1224
        %v1264 = vsub.f32 %v1201, %v1224
        %v1265 = vsub.f32 %v1202, %v1224
        %v1266 = vadd.f32 %v1257, 1e-05
        %v1267 = vrsqrt.pop %v1266
        %v1268 = vmul.f32 %v1267, %v1266
        %v1269 = vmul.f32 %v1268, %v1267
        %v1270 = vmul.f32 0.5, %v1269
        %v1271 = vsub.f32 1.5, %v1270
        %v1272 = vmul.f32 %v1267, %v1271
        %vm1273 = vweird.f32 %v1266
        %vm1274 = vweird.f32 %v1267
        %vm1275 = vmor %vm1273, %vm1274
        %v1276 = vsel %vm1275, %v1267, %v1272
        %v1277 = vmul.f32 %v1258, %v1276
        %v1278 = vmul.f32 %v1259, %v1276
        %v1279 = vmul.f32 %v1260, %v1276
        %v1280 = vmul.f32 %v1261, %v1276
        %v1281 = vmul.f32 %v1262, %v1276
        %v1282 = vmul.f32 %v1263, %v1276
        %v1283 = vmul.f32 %v1264, %v1276
        %v1284 = vmul.f32 %v1265, %v1276
        %v1285 = vmax.f32 %v1277, 0.0
        %v1286 = vmax.f32 %v1278, 0.0
        %v1287 = vmax.f32 %v1279, 0.0
        %v1288 = vmax.f32 %v1280, 0.0
        %v1289 = vmax.f32 %v1281, 0.0
        %v1290 = vmax.f32 %v1282, 0.0
        %v1291 = vmax.f32 %v1283, 0.0
        %v1292 = vmax.f32 %v1284, 0.0
        %1293 = vst.msk [vmem:[#allocation2] sm:$0xff] %vm272, 0.0
        %1294 = vst.msk [vmem:[#allocation2 + $0x8] sm:$0xff] %vm272, 0.0
        %s1295 = scalar_lea.vmem [#allocation2], 144
        %1296 = vst.msk [vmem:[%s1295] sm:$0xff] %vm272, 0.0
        %1297 = vst.msk [vmem:[%s1295 + $0x8] sm:$0xff] %vm272, 0.0
        %s1298 = scalar_lea.vmem [#allocation2], 16
        %vm1299 = vcmask 57344
        %1300 = vst.msk [vmem:[%s1298] sm:$0x1] %vm1299, 0.0
        %1301 = vst.msk [vmem:[%s1298 + $0x10] sm:$0x1] %vm1299, 0.0
        %1302 = vst.msk [vmem:[%s1298 + $0x20] sm:$0x1] %vm1299, 0.0
        %1303 = vst.msk [vmem:[%s1298 + $0x30] sm:$0x1] %vm1299, 0.0
        %1304 = vst.msk [vmem:[%s1298 + $0x40] sm:$0x1] %vm1299, 0.0
        %1305 = vst.msk [vmem:[%s1298 + $0x50] sm:$0x1] %vm1299, 0.0
        %1306 = vst.msk [vmem:[%s1298 + $0x60] sm:$0x1] %vm1299, 0.0
        %1307 = vst.msk [vmem:[%s1298 + $0x70] sm:$0x1] %vm1299, 0.0
        %1308 = vst.msk [vmem:[%s1298 + $0x9] sm:$0x1] %vm1299, 0.0
        %1309 = vst.msk [vmem:[%s1298 + $0x19] sm:$0x1] %vm1299, 0.0
        %1310 = vst.msk [vmem:[%s1298 + $0x29] sm:$0x1] %vm1299, 0.0
        %1311 = vst.msk [vmem:[%s1298 + $0x39] sm:$0x1] %vm1299, 0.0
        %1312 = vst.msk [vmem:[%s1298 + $0x49] sm:$0x1] %vm1299, 0.0
        %1313 = vst.msk [vmem:[%s1298 + $0x59] sm:$0x1] %vm1299, 0.0
        %1314 = vst.msk [vmem:[%s1298 + $0x69] sm:$0x1] %vm1299, 0.0
        %1315 = vst.msk [vmem:[%s1298 + $0x79] sm:$0x1] %vm1299, 0.0
        %1316 = vst.msk [vmem:[%s1298 + $0x1] sm:$0xff] %vm272, %v1285
        %1317 = vst.msk [vmem:[%s1298 + $0x11] sm:$0xff] %vm272, %v1286
        %1318 = vst.msk [vmem:[%s1298 + $0x21] sm:$0xff] %vm272, %v1287
        %1319 = vst.msk [vmem:[%s1298 + $0x31] sm:$0xff] %vm272, %v1288
        %1320 = vst.msk [vmem:[%s1298 + $0x41] sm:$0xff] %vm272, %v1289
        %1321 = vst.msk [vmem:[%s1298 + $0x51] sm:$0xff] %vm272, %v1290
        %1322 = vst.msk [vmem:[%s1298 + $0x61] sm:$0xff] %vm272, %v1291
        %1323 = vst.msk [vmem:[%s1298 + $0x71] sm:$0xff] %vm272, %v1292
        %v1324 = vld [vmem:[#allocation2] sm:$0xff]
        %v1325 = vld [vmem:[#allocation2 + $0x10] sm:$0xff]
        %v1326 = vld [vmem:[#allocation2 + $0x20] sm:$0xff]
        %v1327 = vld [vmem:[#allocation2 + $0x30] sm:$0xff]
        %v1328 = vld [vmem:[#allocation2 + $0x40] sm:$0xff]
        %v1329 = vld [vmem:[#allocation2 + $0x50] sm:$0xff]
        %v1330 = vld [vmem:[#allocation2 + $0x60] sm:$0xff]
        %v1331 = vld [vmem:[#allocation2 + $0x70] sm:$0xff]
        %v1332 = vpack.c.bf16 %v1325, %v1324
        %v1333 = vpack.c.bf16 %v1327, %v1326
        %v1334 = vpack.c.bf16 %v1329, %v1328
        %v1335 = vpack.c.bf16 %v1331, %v1330
        %v1336 = vld [vmem:[%s2] sm:$0xf]
        %v1338 = vsel %vm272, %v1332, 0
        %v1341 = vsel %vm272, %v1333, 0
        %v1344 = vsel %vm272, %v1334, 0
        %v1347 = vsel %vm272, %v1335, 0
        %vm1349 = vcmask 1043456
        %v1351 = vsel %vm1349, %v1336, 0
        %1353 = vmatpush.bf16.msra.mxu0 0
        %1354 = vmatpush.bf16.msra.mxu0 0
        %1355 = vmatpush.bf16.msra.mxu0 0
        %1356 = vmatpush.bf16.msra.mxu0 0
        %1357 = vmatpush.bf16.msra.mxu0 0
        %1358 = vmatpush.bf16.msra.mxu0 0
        %1359 = vmatpush.bf16.msra.mxu0 0
        %1360 = vmatpush.bf16.msra.mxu0 %v1351
        %1361 = vmatmul.bf16.gmra.mxu0 %v1338
        %v1362 = vpop.f32.mrf.mxu0
        %v1363 = vadd.f32 0.0, %v1362
        %v1364 = vpop.f32.mrf.mxu0
        %v1365 = vadd.f32 0.0, %v1364
        %1366 = vmatmul.bf16.gmra.mxu0 %v1341
        %v1367 = vpop.f32.mrf.mxu0
        %v1368 = vadd.f32 0.0, %v1367
        %v1369 = vpop.f32.mrf.mxu0
        %v1370 = vadd.f32 0.0, %v1369
        %1371 = vmatmul.bf16.gmra.mxu0 %v1344
        %v1372 = vpop.f32.mrf.mxu0
        %v1373 = vadd.f32 0.0, %v1372
        %v1374 = vpop.f32.mrf.mxu0
        %v1375 = vadd.f32 0.0, %v1374
        %1376 = vmatmul.bf16.gmra.mxu0 %v1347
        %v1377 = vpop.f32.mrf.mxu0
        %v1378 = vadd.f32 0.0, %v1377
        %v1379 = vpop.f32.mrf.mxu0
        %v1380 = vadd.f32 0.0, %v1379
        %1381 = vdwg.mxu0
        %1382 = vst.msk [vmem:[#allocation3] sm:$0xff] %vm272, %v1363
        %1383 = vst.msk [vmem:[#allocation3 + $0x8] sm:$0xff] %vm272, %v1365
        %1384 = vst.msk [vmem:[#allocation3 + $0x10] sm:$0xff] %vm272, %v1368
        %1385 = vst.msk [vmem:[#allocation3 + $0x18] sm:$0xff] %vm272, %v1370
        %1386 = vst.msk [vmem:[#allocation3 + $0x20] sm:$0xff] %vm272, %v1373
        %1387 = vst.msk [vmem:[#allocation3 + $0x28] sm:$0xff] %vm272, %v1375
        %1388 = vst.msk [vmem:[#allocation3 + $0x30] sm:$0xff] %vm272, %v1378
        %1389 = vst.msk [vmem:[#allocation3 + $0x38] sm:$0xff] %vm272, %v1380
        %v1390 = vld [vmem:[#allocation2 + $0x1] sm:$0xff]
        %v1391 = vld [vmem:[#allocation2 + $0x11] sm:$0xff]
        %v1392 = vld [vmem:[#allocation2 + $0x21] sm:$0xff]
        %v1393 = vld [vmem:[#allocation2 + $0x31] sm:$0xff]
        %v1394 = vld [vmem:[#allocation2 + $0x41] sm:$0xff]
        %v1395 = vld [vmem:[#allocation2 + $0x51] sm:$0xff]
        %v1396 = vld [vmem:[#allocation2 + $0x61] sm:$0xff]
        %v1397 = vld [vmem:[#allocation2 + $0x71] sm:$0xff]
        %v1398 = vpack.c.bf16 %v1391, %v1390
        %v1399 = vpack.c.bf16 %v1393, %v1392
        %v1400 = vpack.c.bf16 %v1395, %v1394
        %v1401 = vpack.c.bf16 %v1397, %v1396
        %s1402 = scalar_lea.vmem %s2, 4
        %v1403 = vld [vmem:[%s1402] sm:$0xf]
        %v1405 = vsel %vm272, %v1398, 0
        %v1408 = vsel %vm272, %v1399, 0
        %v1411 = vsel %vm272, %v1400, 0
        %v1414 = vsel %vm272, %v1401, 0
        %v1417 = vsel %vm1349, %v1403, 0
        %1419 = vmatpush.bf16.msra.mxu0 0
        %1420 = vmatpush.bf16.msra.mxu0 0
        %1421 = vmatpush.bf16.msra.mxu0 0
        %1422 = vmatpush.bf16.msra.mxu0 0
        %1423 = vmatpush.bf16.msra.mxu0 0
        %1424 = vmatpush.bf16.msra.mxu0 0
        %1425 = vmatpush.bf16.msra.mxu0 0
        %1426 = vmatpush.bf16.msra.mxu0 %v1417
        %1427 = vmatmul.bf16.gmra.mxu0 %v1405
        %v1428 = vpop.f32.mrf.mxu0
        %v1429 = vadd.f32 0.0, %v1428
        %v1430 = vpop.f32.mrf.mxu0
        %v1431 = vadd.f32 0.0, %v1430
        %1432 = vmatmul.bf16.gmra.mxu0 %v1408
        %v1433 = vpop.f32.mrf.mxu0
        %v1434 = vadd.f32 0.0, %v1433
        %v1435 = vpop.f32.mrf.mxu0
        %v1436 = vadd.f32 0.0, %v1435
        %1437 = vmatmul.bf16.gmra.mxu0 %v1411
        %v1438 = vpop.f32.mrf.mxu0
        %v1439 = vadd.f32 0.0, %v1438
        %v1440 = vpop.f32.mrf.mxu0
        %v1441 = vadd.f32 0.0, %v1440
        %1442 = vmatmul.bf16.gmra.mxu0 %v1414
        %v1443 = vpop.f32.mrf.mxu0
        %v1444 = vadd.f32 0.0, %v1443
        %v1445 = vpop.f32.mrf.mxu0
        %v1446 = vadd.f32 0.0, %v1445
        %1447 = vdwg.mxu0
        %v1448 = vld [vmem:[#allocation3] sm:$0xff]
        %v1449 = vld [vmem:[#allocation3 + $0x8] sm:$0xff]
        %v1450 = vld [vmem:[#allocation3 + $0x10] sm:$0xff]
        %v1451 = vld [vmem:[#allocation3 + $0x18] sm:$0xff]
        %v1452 = vld [vmem:[#allocation3 + $0x20] sm:$0xff]
        %v1453 = vld [vmem:[#allocation3 + $0x28] sm:$0xff]
        %v1454 = vld [vmem:[#allocation3 + $0x30] sm:$0xff]
        %v1455 = vld [vmem:[#allocation3 + $0x38] sm:$0xff]
        %v1456 = vadd.f32 %v1448, %v1429
        %v1457 = vadd.f32 %v1449, %v1431
        %v1458 = vadd.f32 %v1450, %v1434
        %v1459 = vadd.f32 %v1451, %v1436
        %v1460 = vadd.f32 %v1452, %v1439
        %v1461 = vadd.f32 %v1453, %v1441
        %v1462 = vadd.f32 %v1454, %v1444
        %v1463 = vadd.f32 %v1455, %v1446
        %1464 = vst.msk [vmem:[#allocation3] sm:$0xff] %vm272, %v1456
        %1465 = vst.msk [vmem:[#allocation3 + $0x8] sm:$0xff] %vm272, %v1457
        %1466 = vst.msk [vmem:[#allocation3 + $0x10] sm:$0xff] %vm272, %v1458
        %1467 = vst.msk [vmem:[#allocation3 + $0x18] sm:$0xff] %vm272, %v1459
        %1468 = vst.msk [vmem:[#allocation3 + $0x20] sm:$0xff] %vm272, %v1460
        %1469 = vst.msk [vmem:[#allocation3 + $0x28] sm:$0xff] %vm272, %v1461
        %1470 = vst.msk [vmem:[#allocation3 + $0x30] sm:$0xff] %vm272, %v1462
        %1471 = vst.msk [vmem:[#allocation3 + $0x38] sm:$0xff] %vm272, %v1463
        %v1472 = vld [vmem:[#allocation2 + $0x2] sm:$0xff]
        %v1473 = vld [vmem:[#allocation2 + $0x12] sm:$0xff]
        %v1474 = vld [vmem:[#allocation2 + $0x22] sm:$0xff]
        %v1475 = vld [vmem:[#allocation2 + $0x32] sm:$0xff]
        %v1476 = vld [vmem:[#allocation2 + $0x42] sm:$0xff]
        %v1477 = vld [vmem:[#allocation2 + $0x52] sm:$0xff]
        %v1478 = vld [vmem:[#allocation2 + $0x62] sm:$0xff]
        %v1479 = vld [vmem:[#allocation2 + $0x72] sm:$0xff]
        %v1480 = vpack.c.bf16 %v1473, %v1472
        %v1481 = vpack.c.bf16 %v1475, %v1474
        %v1482 = vpack.c.bf16 %v1477, %v1476
        %v1483 = vpack.c.bf16 %v1479, %v1478
        %s1484 = scalar_lea.vmem %s2, 8
        %v1485 = vld [vmem:[%s1484] sm:$0xf]
        %v1487 = vsel %vm272, %v1480, 0
        %v1490 = vsel %vm272, %v1481, 0
        %v1493 = vsel %vm272, %v1482, 0
        %v1496 = vsel %vm272, %v1483, 0
        %v1499 = vsel %vm1349, %v1485, 0
        %1501 = vmatpush.bf16.msra.mxu0 0
        %1502 = vmatpush.bf16.msra.mxu0 0
        %1503 = vmatpush.bf16.msra.mxu0 0
        %1504 = vmatpush.bf16.msra.mxu0 0
        %1505 = vmatpush.bf16.msra.mxu0 0
        %1506 = vmatpush.bf16.msra.mxu0 0
        %1507 = vmatpush.bf16.msra.mxu0 0
        %1508 = vmatpush.bf16.msra.mxu0 %v1499
        %1509 = vmatmul.bf16.gmra.mxu0 %v1487
        %v1510 = vpop.f32.mrf.mxu0
        %v1511 = vadd.f32 0.0, %v1510
        %v1512 = vpop.f32.mrf.mxu0
        %v1513 = vadd.f32 0.0, %v1512
        %1514 = vmatmul.bf16.gmra.mxu0 %v1490
        %v1515 = vpop.f32.mrf.mxu0
        %v1516 = vadd.f32 0.0, %v1515
        %v1517 = vpop.f32.mrf.mxu0
        %v1518 = vadd.f32 0.0, %v1517
        %1519 = vmatmul.bf16.gmra.mxu0 %v1493
        %v1520 = vpop.f32.mrf.mxu0
        %v1521 = vadd.f32 0.0, %v1520
        %v1522 = vpop.f32.mrf.mxu0
        %v1523 = vadd.f32 0.0, %v1522
        %1524 = vmatmul.bf16.gmra.mxu0 %v1496
        %v1525 = vpop.f32.mrf.mxu0
        %v1526 = vadd.f32 0.0, %v1525
        %v1527 = vpop.f32.mrf.mxu0
        %v1528 = vadd.f32 0.0, %v1527
        %1529 = vdwg.mxu0
        %v1530 = vld [vmem:[#allocation3] sm:$0xff]
        %v1531 = vld [vmem:[#allocation3 + $0x8] sm:$0xff]
        %v1532 = vld [vmem:[#allocation3 + $0x10] sm:$0xff]
        %v1533 = vld [vmem:[#allocation3 + $0x18] sm:$0xff]
        %v1534 = vld [vmem:[#allocation3 + $0x20] sm:$0xff]
        %v1535 = vld [vmem:[#allocation3 + $0x28] sm:$0xff]
        %v1536 = vld [vmem:[#allocation3 + $0x30] sm:$0xff]
        %v1537 = vld [vmem:[#allocation3 + $0x38] sm:$0xff]
        %v1538 = vadd.f32 %v1530, %v1511
        %v1539 = vadd.f32 %v1531, %v1513
        %v1540 = vadd.f32 %v1532, %v1516
        %v1541 = vadd.f32 %v1533, %v1518
        %v1542 = vadd.f32 %v1534, %v1521
        %v1543 = vadd.f32 %v1535, %v1523
        %v1544 = vadd.f32 %v1536, %v1526
        %v1545 = vadd.f32 %v1537, %v1528
        %1546 = vst.msk [vmem:[#allocation3] sm:$0xff] %vm272, %v1538
        %1547 = vst.msk [vmem:[#allocation3 + $0x8] sm:$0xff] %vm272, %v1539
        %1548 = vst.msk [vmem:[#allocation3 + $0x10] sm:$0xff] %vm272, %v1540
        %1549 = vst.msk [vmem:[#allocation3 + $0x18] sm:$0xff] %vm272, %v1541
        %1550 = vst.msk [vmem:[#allocation3 + $0x20] sm:$0xff] %vm272, %v1542
        %1551 = vst.msk [vmem:[#allocation3 + $0x28] sm:$0xff] %vm272, %v1543
        %1552 = vst.msk [vmem:[#allocation3 + $0x30] sm:$0xff] %vm272, %v1544
        %1553 = vst.msk [vmem:[#allocation3 + $0x38] sm:$0xff] %vm272, %v1545
        %v1554 = vld [vmem:[%s1298] sm:$0xff]
        %v1555 = vld [vmem:[%s1298 + $0x10] sm:$0xff]
        %v1556 = vld [vmem:[%s1298 + $0x20] sm:$0xff]
        %v1557 = vld [vmem:[%s1298 + $0x30] sm:$0xff]
        %v1558 = vld [vmem:[%s1298 + $0x40] sm:$0xff]
        %v1559 = vld [vmem:[%s1298 + $0x50] sm:$0xff]
        %v1560 = vld [vmem:[%s1298 + $0x60] sm:$0xff]
        %v1561 = vld [vmem:[%s1298 + $0x70] sm:$0xff]
        %v1562 = vpack.c.bf16 %v1555, %v1554
        %v1563 = vpack.c.bf16 %v1557, %v1556
        %v1564 = vpack.c.bf16 %v1559, %v1558
        %v1565 = vpack.c.bf16 %v1561, %v1560
        %s1566 = scalar_lea.vmem %s2, 12
        %v1567 = vld [vmem:[%s1566] sm:$0xf]
        %v1569 = vsel %vm272, %v1562, 0
        %v1572 = vsel %vm272, %v1563, 0
        %v1575 = vsel %vm272, %v1564, 0
        %v1578 = vsel %vm272, %v1565, 0
        %v1581 = vsel %vm1349, %v1567, 0
        %1583 = vmatpush.bf16.msra.mxu0 0
        %1584 = vmatpush.bf16.msra.mxu0 0
        %1585 = vmatpush.bf16.msra.mxu0 0
        %1586 = vmatpush.bf16.msra.mxu0 0
        %1587 = vmatpush.bf16.msra.mxu0 0
        %1588 = vmatpush.bf16.msra.mxu0 0
        %1589 = vmatpush.bf16.msra.mxu0 0
        %1590 = vmatpush.bf16.msra.mxu0 %v1581
        %1591 = vmatmul.bf16.gmra.mxu0 %v1569
        %v1592 = vpop.f32.mrf.mxu0
        %v1593 = vadd.f32 0.0, %v1592
        %v1594 = vpop.f32.mrf.mxu0
        %v1595 = vadd.f32 0.0, %v1594
        %1596 = vmatmul.bf16.gmra.mxu0 %v1572
        %v1597 = vpop.f32.mrf.mxu0
        %v1598 = vadd.f32 0.0, %v1597
        %v1599 = vpop.f32.mrf.mxu0
        %v1600 = vadd.f32 0.0, %v1599
        %1601 = vmatmul.bf16.gmra.mxu0 %v1575
        %v1602 = vpop.f32.mrf.mxu0
        %v1603 = vadd.f32 0.0, %v1602
        %v1604 = vpop.f32.mrf.mxu0
        %v1605 = vadd.f32 0.0, %v1604
        %1606 = vmatmul.bf16.gmra.mxu0 %v1578
        %v1607 = vpop.f32.mrf.mxu0
        %v1608 = vadd.f32 0.0, %v1607
        %v1609 = vpop.f32.mrf.mxu0
        %v1610 = vadd.f32 0.0, %v1609
        %1611 = vdwg.mxu0
        %v1612 = vld [vmem:[#allocation3] sm:$0xff]
        %v1613 = vld [vmem:[#allocation3 + $0x8] sm:$0xff]
        %v1614 = vld [vmem:[#allocation3 + $0x10] sm:$0xff]
        %v1615 = vld [vmem:[#allocation3 + $0x18] sm:$0xff]
        %v1616 = vld [vmem:[#allocation3 + $0x20] sm:$0xff]
        %v1617 = vld [vmem:[#allocation3 + $0x28] sm:$0xff]
        %v1618 = vld [vmem:[#allocation3 + $0x30] sm:$0xff]
        %v1619 = vld [vmem:[#allocation3 + $0x38] sm:$0xff]
        %v1620 = vadd.f32 %v1612, %v1593
        %v1621 = vadd.f32 %v1613, %v1595
        %v1622 = vadd.f32 %v1614, %v1598
        %v1623 = vadd.f32 %v1615, %v1600
        %v1624 = vadd.f32 %v1616, %v1603
        %v1625 = vadd.f32 %v1617, %v1605
        %v1626 = vadd.f32 %v1618, %v1608
        %v1627 = vadd.f32 %v1619, %v1610
        %1628 = vst.msk [vmem:[#allocation3] sm:$0xff] %vm272, %v1620
        %1629 = vst.msk [vmem:[#allocation3 + $0x8] sm:$0xff] %vm272, %v1621
        %1630 = vst.msk [vmem:[#allocation3 + $0x10] sm:$0xff] %vm272, %v1622
        %1631 = vst.msk [vmem:[#allocation3 + $0x18] sm:$0xff] %vm272, %v1623
        %1632 = vst.msk [vmem:[#allocation3 + $0x20] sm:$0xff] %vm272, %v1624
        %1633 = vst.msk [vmem:[#allocation3 + $0x28] sm:$0xff] %vm272, %v1625
        %1634 = vst.msk [vmem:[#allocation3 + $0x30] sm:$0xff] %vm272, %v1626
        %1635 = vst.msk [vmem:[#allocation3 + $0x38] sm:$0xff] %vm272, %v1627
        %v1636 = vld [vmem:[%s1298 + $0x1] sm:$0xff]
        %v1637 = vld [vmem:[%s1298 + $0x11] sm:$0xff]
        %v1638 = vld [vmem:[%s1298 + $0x21] sm:$0xff]
        %v1639 = vld [vmem:[%s1298 + $0x31] sm:$0xff]
        %v1640 = vld [vmem:[%s1298 + $0x41] sm:$0xff]
        %v1641 = vld [vmem:[%s1298 + $0x51] sm:$0xff]
        %v1642 = vld [vmem:[%s1298 + $0x61] sm:$0xff]
        %v1643 = vld [vmem:[%s1298 + $0x71] sm:$0xff]
        %v1644 = vpack.c.bf16 %v1637, %v1636
        %v1645 = vpack.c.bf16 %v1639, %v1638
        %v1646 = vpack.c.bf16 %v1641, %v1640
        %v1647 = vpack.c.bf16 %v1643, %v1642
        %s1648 = scalar_lea.vmem %s2, 16
        %v1649 = vld [vmem:[%s1648] sm:$0xf]
        %v1651 = vsel %vm272, %v1644, 0
        %v1654 = vsel %vm272, %v1645, 0
        %v1657 = vsel %vm272, %v1646, 0
        %v1660 = vsel %vm272, %v1647, 0
        %v1663 = vsel %vm1349, %v1649, 0
        %1665 = vmatpush.bf16.msra.mxu0 0
        %1666 = vmatpush.bf16.msra.mxu0 0
        %1667 = vmatpush.bf16.msra.mxu0 0
        %1668 = vmatpush.bf16.msra.mxu0 0
        %1669 = vmatpush.bf16.msra.mxu0 0
        %1670 = vmatpush.bf16.msra.mxu0 0
        %1671 = vmatpush.bf16.msra.mxu0 0
        %1672 = vmatpush.bf16.msra.mxu0 %v1663
        %1673 = vmatmul.bf16.gmra.mxu0 %v1651
        %v1674 = vpop.f32.mrf.mxu0
        %v1675 = vadd.f32 0.0, %v1674
        %v1676 = vpop.f32.mrf.mxu0
        %v1677 = vadd.f32 0.0, %v1676
        %1678 = vmatmul.bf16.gmra.mxu0 %v1654
        %v1679 = vpop.f32.mrf.mxu0
        %v1680 = vadd.f32 0.0, %v1679
        %v1681 = vpop.f32.mrf.mxu0
        %v1682 = vadd.f32 0.0, %v1681
        %1683 = vmatmul.bf16.gmra.mxu0 %v1657
        %v1684 = vpop.f32.mrf.mxu0
        %v1685 = vadd.f32 0.0, %v1684
        %v1686 = vpop.f32.mrf.mxu0
        %v1687 = vadd.f32 0.0, %v1686
        %1688 = vmatmul.bf16.gmra.mxu0 %v1660
        %v1689 = vpop.f32.mrf.mxu0
        %v1690 = vadd.f32 0.0, %v1689
        %v1691 = vpop.f32.mrf.mxu0
        %v1692 = vadd.f32 0.0, %v1691
        %1693 = vdwg.mxu0
        %v1694 = vld [vmem:[#allocation3] sm:$0xff]
        %v1695 = vld [vmem:[#allocation3 + $0x8] sm:$0xff]
        %v1696 = vld [vmem:[#allocation3 + $0x10] sm:$0xff]
        %v1697 = vld [vmem:[#allocation3 + $0x18] sm:$0xff]
        %v1698 = vld [vmem:[#allocation3 + $0x20] sm:$0xff]
        %v1699 = vld [vmem:[#allocation3 + $0x28] sm:$0xff]
        %v1700 = vld [vmem:[#allocation3 + $0x30] sm:$0xff]
        %v1701 = vld [vmem:[#allocation3 + $0x38] sm:$0xff]
        %v1702 = vadd.f32 %v1694, %v1675
        %v1703 = vadd.f32 %v1695, %v1677
        %v1704 = vadd.f32 %v1696, %v1680
        %v1705 = vadd.f32 %v1697, %v1682
        %v1706 = vadd.f32 %v1698, %v1685
        %v1707 = vadd.f32 %v1699, %v1687
        %v1708 = vadd.f32 %v1700, %v1690
        %v1709 = vadd.f32 %v1701, %v1692
        %1710 = vst.msk [vmem:[#allocation3] sm:$0xff] %vm272, %v1702
        %1711 = vst.msk [vmem:[#allocation3 + $0x8] sm:$0xff] %vm272, %v1703
        %1712 = vst.msk [vmem:[#allocation3 + $0x10] sm:$0xff] %vm272, %v1704
        %1713 = vst.msk [vmem:[#allocation3 + $0x18] sm:$0xff] %vm272, %v1705
        %1714 = vst.msk [vmem:[#allocation3 + $0x20] sm:$0xff] %vm272, %v1706
        %1715 = vst.msk [vmem:[#allocation3 + $0x28] sm:$0xff] %vm272, %v1707
        %1716 = vst.msk [vmem:[#allocation3 + $0x30] sm:$0xff] %vm272, %v1708
        %1717 = vst.msk [vmem:[#allocation3 + $0x38] sm:$0xff] %vm272, %v1709
        %v1718 = vld [vmem:[%s1298 + $0x2] sm:$0xff]
        %v1719 = vld [vmem:[%s1298 + $0x12] sm:$0xff]
        %v1720 = vld [vmem:[%s1298 + $0x22] sm:$0xff]
        %v1721 = vld [vmem:[%s1298 + $0x32] sm:$0xff]
        %v1722 = vld [vmem:[%s1298 + $0x42] sm:$0xff]
        %v1723 = vld [vmem:[%s1298 + $0x52] sm:$0xff]
        %v1724 = vld [vmem:[%s1298 + $0x62] sm:$0xff]
        %v1725 = vld [vmem:[%s1298 + $0x72] sm:$0xff]
        %v1726 = vpack.c.bf16 %v1719, %v1718
        %v1727 = vpack.c.bf16 %v1721, %v1720
        %v1728 = vpack.c.bf16 %v1723, %v1722
        %v1729 = vpack.c.bf16 %v1725, %v1724
        %s1730 = scalar_lea.vmem %s2, 20
        %v1731 = vld [vmem:[%s1730] sm:$0xf]
        %v1733 = vsel %vm272, %v1726, 0
        %v1736 = vsel %vm272, %v1727, 0
        %v1739 = vsel %vm272, %v1728, 0
        %v1742 = vsel %vm272, %v1729, 0
        %v1745 = vsel %vm1349, %v1731, 0
        %1747 = vmatpush.bf16.msra.mxu0 0
        %1748 = vmatpush.bf16.msra.mxu0 0
        %1749 = vmatpush.bf16.msra.mxu0 0
        %1750 = vmatpush.bf16.msra.mxu0 0
        %1751 = vmatpush.bf16.msra.mxu0 0
        %1752 = vmatpush.bf16.msra.mxu0 0
        %1753 = vmatpush.bf16.msra.mxu0 0
        %1754 = vmatpush.bf16.msra.mxu0 %v1745
        %1755 = vmatmul.bf16.gmra.mxu0 %v1733
        %v1756 = vpop.f32.mrf.mxu0
        %v1757 = vadd.f32 0.0, %v1756
        %v1758 = vpop.f32.mrf.mxu0
        %v1759 = vadd.f32 0.0, %v1758
        %1760 = vmatmul.bf16.gmra.mxu0 %v1736
        %v1761 = vpop.f32.mrf.mxu0
        %v1762 = vadd.f32 0.0, %v1761
        %v1763 = vpop.f32.mrf.mxu0
        %v1764 = vadd.f32 0.0, %v1763
        %1765 = vmatmul.bf16.gmra.mxu0 %v1739
        %v1766 = vpop.f32.mrf.mxu0
        %v1767 = vadd.f32 0.0, %v1766
        %v1768 = vpop.f32.mrf.mxu0
        %v1769 = vadd.f32 0.0, %v1768
        %1770 = vmatmul.bf16.gmra.mxu0 %v1742
        %v1771 = vpop.f32.mrf.mxu0
        %v1772 = vadd.f32 0.0, %v1771
        %v1773 = vpop.f32.mrf.mxu0
        %v1774 = vadd.f32 0.0, %v1773
        %1775 = vdwg.mxu0
        %v1776 = vld [vmem:[#allocation3] sm:$0xff]
        %v1777 = vld [vmem:[#allocation3 + $0x8] sm:$0xff]
        %v1778 = vld [vmem:[#allocation3 + $0x10] sm:$0xff]
        %v1779 = vld [vmem:[#allocation3 + $0x18] sm:$0xff]
        %v1780 = vld [vmem:[#allocation3 + $0x20] sm:$0xff]
        %v1781 = vld [vmem:[#allocation3 + $0x28] sm:$0xff]
        %v1782 = vld [vmem:[#allocation3 + $0x30] sm:$0xff]
        %v1783 = vld [vmem:[#allocation3 + $0x38] sm:$0xff]
        %v1784 = vadd.f32 %v1776, %v1757
        %v1785 = vadd.f32 %v1777, %v1759
        %v1786 = vadd.f32 %v1778, %v1762
        %v1787 = vadd.f32 %v1779, %v1764
        %v1788 = vadd.f32 %v1780, %v1767
        %v1789 = vadd.f32 %v1781, %v1769
        %v1790 = vadd.f32 %v1782, %v1772
        %v1791 = vadd.f32 %v1783, %v1774
        %1792 = vst.msk [vmem:[#allocation3] sm:$0xff] %vm272, %v1784
        %1793 = vst.msk [vmem:[#allocation3 + $0x8] sm:$0xff] %vm272, %v1785
        %1794 = vst.msk [vmem:[#allocation3 + $0x10] sm:$0xff] %vm272, %v1786
        %1795 = vst.msk [vmem:[#allocation3 + $0x18] sm:$0xff] %vm272, %v1787
        %1796 = vst.msk [vmem:[#allocation3 + $0x20] sm:$0xff] %vm272, %v1788
        %1797 = vst.msk [vmem:[#allocation3 + $0x28] sm:$0xff] %vm272, %v1789
        %1798 = vst.msk [vmem:[#allocation3 + $0x30] sm:$0xff] %vm272, %v1790
        %1799 = vst.msk [vmem:[#allocation3 + $0x38] sm:$0xff] %vm272, %v1791
        %s1800 = scalar_lea.vmem [#allocation2], 32
        %v1801 = vld [vmem:[%s1800] sm:$0xff]
        %v1802 = vld [vmem:[%s1800 + $0x10] sm:$0xff]
        %v1803 = vld [vmem:[%s1800 + $0x20] sm:$0xff]
        %v1804 = vld [vmem:[%s1800 + $0x30] sm:$0xff]
        %v1805 = vld [vmem:[%s1800 + $0x40] sm:$0xff]
        %v1806 = vld [vmem:[%s1800 + $0x50] sm:$0xff]
        %v1807 = vld [vmem:[%s1800 + $0x60] sm:$0xff]
        %v1808 = vld [vmem:[%s1800 + $0x70] sm:$0xff]
        %v1809 = vpack.c.bf16 %v1802, %v1801
        %v1810 = vpack.c.bf16 %v1804, %v1803
        %v1811 = vpack.c.bf16 %v1806, %v1805
        %v1812 = vpack.c.bf16 %v1808, %v1807
        %s1813 = scalar_lea.vmem %s2, 24
        %v1814 = vld [vmem:[%s1813] sm:$0xf]
        %v1816 = vsel %vm272, %v1809, 0
        %v1819 = vsel %vm272, %v1810, 0
        %v1822 = vsel %vm272, %v1811, 0
        %v1825 = vsel %vm272, %v1812, 0
        %v1828 = vsel %vm1349, %v1814, 0
        %1830 = vmatpush.bf16.msra.mxu0 0
        %1831 = vmatpush.bf16.msra.mxu0 0
        %1832 = vmatpush.bf16.msra.mxu0 0
        %1833 = vmatpush.bf16.msra.mxu0 0
        %1834 = vmatpush.bf16.msra.mxu0 0
        %1835 = vmatpush.bf16.msra.mxu0 0
        %1836 = vmatpush.bf16.msra.mxu0 0
        %1837 = vmatpush.bf16.msra.mxu0 %v1828
        %1838 = vmatmul.bf16.gmra.mxu0 %v1816
        %v1839 = vpop.f32.mrf.mxu0
        %v1840 = vadd.f32 0.0, %v1839
        %v1841 = vpop.f32.mrf.mxu0
        %v1842 = vadd.f32 0.0, %v1841
        %1843 = vmatmul.bf16.gmra.mxu0 %v1819
        %v1844 = vpop.f32.mrf.mxu0
        %v1845 = vadd.f32 0.0, %v1844
        %v1846 = vpop.f32.mrf.mxu0
        %v1847 = vadd.f32 0.0, %v1846
        %1848 = vmatmul.bf16.gmra.mxu0 %v1822
        %v1849 = vpop.f32.mrf.mxu0
        %v1850 = vadd.f32 0.0, %v1849
        %v1851 = vpop.f32.mrf.mxu0
        %v1852 = vadd.f32 0.0, %v1851
        %1853 = vmatmul.bf16.gmra.mxu0 %v1825
        %v1854 = vpop.f32.mrf.mxu0
        %v1855 = vadd.f32 0.0, %v1854
        %v1856 = vpop.f32.mrf.mxu0
        %v1857 = vadd.f32 0.0, %v1856
        %1858 = vdwg.mxu0
        %v1859 = vld [vmem:[#allocation3] sm:$0xff]
        %v1860 = vld [vmem:[#allocation3 + $0x8] sm:$0xff]
        %v1861 = vld [vmem:[#allocation3 + $0x10] sm:$0xff]
        %v1862 = vld [vmem:[#allocation3 + $0x18] sm:$0xff]
        %v1863 = vld [vmem:[#allocation3 + $0x20] sm:$0xff]
        %v1864 = vld [vmem:[#allocation3 + $0x28] sm:$0xff]
        %v1865 = vld [vmem:[#allocation3 + $0x30] sm:$0xff]
        %v1866 = vld [vmem:[#allocation3 + $0x38] sm:$0xff]
        %v1867 = vadd.f32 %v1859, %v1840
        %v1868 = vadd.f32 %v1860, %v1842
        %v1869 = vadd.f32 %v1861, %v1845
        %v1870 = vadd.f32 %v1862, %v1847
        %v1871 = vadd.f32 %v1863, %v1850
        %v1872 = vadd.f32 %v1864, %v1852
        %v1873 = vadd.f32 %v1865, %v1855
        %v1874 = vadd.f32 %v1866, %v1857
        %1875 = vst.msk [vmem:[#allocation3] sm:$0xff] %vm272, %v1867
        %1876 = vst.msk [vmem:[#allocation3 + $0x8] sm:$0xff] %vm272, %v1868
        %1877 = vst.msk [vmem:[#allocation3 + $0x10] sm:$0xff] %vm272, %v1869
        %1878 = vst.msk [vmem:[#allocation3 + $0x18] sm:$0xff] %vm272, %v1870
        %1879 = vst.msk [vmem:[#allocation3 + $0x20] sm:$0xff] %vm272, %v1871
        %1880 = vst.msk [vmem:[#allocation3 + $0x28] sm:$0xff] %vm272, %v1872
        %1881 = vst.msk [vmem:[#allocation3 + $0x30] sm:$0xff] %vm272, %v1873
        %1882 = vst.msk [vmem:[#allocation3 + $0x38] sm:$0xff] %vm272, %v1874
        %v1883 = vld [vmem:[%s1800 + $0x1] sm:$0xff]
        %v1884 = vld [vmem:[%s1800 + $0x11] sm:$0xff]
        %v1885 = vld [vmem:[%s1800 + $0x21] sm:$0xff]
        %v1886 = vld [vmem:[%s1800 + $0x31] sm:$0xff]
        %v1887 = vld [vmem:[%s1800 + $0x41] sm:$0xff]
        %v1888 = vld [vmem:[%s1800 + $0x51] sm:$0xff]
        %v1889 = vld [vmem:[%s1800 + $0x61] sm:$0xff]
        %v1890 = vld [vmem:[%s1800 + $0x71] sm:$0xff]
        %v1891 = vpack.c.bf16 %v1884, %v1883
        %v1892 = vpack.c.bf16 %v1886, %v1885
        %v1893 = vpack.c.bf16 %v1888, %v1887
        %v1894 = vpack.c.bf16 %v1890, %v1889
        %s1895 = scalar_lea.vmem %s2, 28
        %v1896 = vld [vmem:[%s1895] sm:$0xf]
        %v1898 = vsel %vm272, %v1891, 0
        %v1901 = vsel %vm272, %v1892, 0
        %v1904 = vsel %vm272, %v1893, 0
        %v1907 = vsel %vm272, %v1894, 0
        %v1910 = vsel %vm1349, %v1896, 0
        %1912 = vmatpush.bf16.msra.mxu0 0
        %1913 = vmatpush.bf16.msra.mxu0 0
        %1914 = vmatpush.bf16.msra.mxu0 0
        %1915 = vmatpush.bf16.msra.mxu0 0
        %1916 = vmatpush.bf16.msra.mxu0 0
        %1917 = vmatpush.bf16.msra.mxu0 0
        %1918 = vmatpush.bf16.msra.mxu0 0
        %1919 = vmatpush.bf16.msra.mxu0 %v1910
        %1920 = vmatmul.bf16.gmra.mxu0 %v1898
        %v1921 = vpop.f32.mrf.mxu0
        %v1922 = vadd.f32 0.0, %v1921
        %v1923 = vpop.f32.mrf.mxu0
        %v1924 = vadd.f32 0.0, %v1923
        %1925 = vmatmul.bf16.gmra.mxu0 %v1901
        %v1926 = vpop.f32.mrf.mxu0
        %v1927 = vadd.f32 0.0, %v1926
        %v1928 = vpop.f32.mrf.mxu0
        %v1929 = vadd.f32 0.0, %v1928
        %1930 = vmatmul.bf16.gmra.mxu0 %v1904
        %v1931 = vpop.f32.mrf.mxu0
        %v1932 = vadd.f32 0.0, %v1931
        %v1933 = vpop.f32.mrf.mxu0
        %v1934 = vadd.f32 0.0, %v1933
        %1935 = vmatmul.bf16.gmra.mxu0 %v1907
        %v1936 = vpop.f32.mrf.mxu0
        %v1937 = vadd.f32 0.0, %v1936
        %v1938 = vpop.f32.mrf.mxu0
        %v1939 = vadd.f32 0.0, %v1938
        %1940 = vdwg.mxu0
        %v1941 = vld [vmem:[#allocation3] sm:$0xff]
        %v1942 = vld [vmem:[#allocation3 + $0x8] sm:$0xff]
        %v1943 = vld [vmem:[#allocation3 + $0x10] sm:$0xff]
        %v1944 = vld [vmem:[#allocation3 + $0x18] sm:$0xff]
        %v1945 = vld [vmem:[#allocation3 + $0x20] sm:$0xff]
        %v1946 = vld [vmem:[#allocation3 + $0x28] sm:$0xff]
        %v1947 = vld [vmem:[#allocation3 + $0x30] sm:$0xff]
        %v1948 = vld [vmem:[#allocation3 + $0x38] sm:$0xff]
        %v1949 = vadd.f32 %v1941, %v1922
        %v1950 = vadd.f32 %v1942, %v1924
        %v1951 = vadd.f32 %v1943, %v1927
        %v1952 = vadd.f32 %v1944, %v1929
        %v1953 = vadd.f32 %v1945, %v1932
        %v1954 = vadd.f32 %v1946, %v1934
        %v1955 = vadd.f32 %v1947, %v1937
        %v1956 = vadd.f32 %v1948, %v1939
        %1957 = vst.msk [vmem:[#allocation3] sm:$0xff] %vm272, %v1949
        %1958 = vst.msk [vmem:[#allocation3 + $0x8] sm:$0xff] %vm272, %v1950
        %1959 = vst.msk [vmem:[#allocation3 + $0x10] sm:$0xff] %vm272, %v1951
        %1960 = vst.msk [vmem:[#allocation3 + $0x18] sm:$0xff] %vm272, %v1952
        %1961 = vst.msk [vmem:[#allocation3 + $0x20] sm:$0xff] %vm272, %v1953
        %1962 = vst.msk [vmem:[#allocation3 + $0x28] sm:$0xff] %vm272, %v1954
        %1963 = vst.msk [vmem:[#allocation3 + $0x30] sm:$0xff] %vm272, %v1955
        %1964 = vst.msk [vmem:[#allocation3 + $0x38] sm:$0xff] %vm272, %v1956
        %v1965 = vld [vmem:[%s1800 + $0x2] sm:$0xff]
        %v1966 = vld [vmem:[%s1800 + $0x12] sm:$0xff]
        %v1967 = vld [vmem:[%s1800 + $0x22] sm:$0xff]
        %v1968 = vld [vmem:[%s1800 + $0x32] sm:$0xff]
        %v1969 = vld [vmem:[%s1800 + $0x42] sm:$0xff]
        %v1970 = vld [vmem:[%s1800 + $0x52] sm:$0xff]
        %v1971 = vld [vmem:[%s1800 + $0x62] sm:$0xff]
        %v1972 = vld [vmem:[%s1800 + $0x72] sm:$0xff]
        %v1973 = vpack.c.bf16 %v1966, %v1965
        %v1974 = vpack.c.bf16 %v1968, %v1967
        %v1975 = vpack.c.bf16 %v1970, %v1969
        %v1976 = vpack.c.bf16 %v1972, %v1971
        %s1977 = scalar_lea.vmem %s2, 32
        %v1978 = vld [vmem:[%s1977] sm:$0xf]
        %v1980 = vsel %vm272, %v1973, 0
        %v1983 = vsel %vm272, %v1974, 0
        %v1986 = vsel %vm272, %v1975, 0
        %v1989 = vsel %vm272, %v1976, 0
        %v1992 = vsel %vm1349, %v1978, 0
        %1994 = vmatpush.bf16.msra.mxu0 0
        %1995 = vmatpush.bf16.msra.mxu0 0
        %1996 = vmatpush.bf16.msra.mxu0 0
        %1997 = vmatpush.bf16.msra.mxu0 0
        %1998 = vmatpush.bf16.msra.mxu0 0
        %1999 = vmatpush.bf16.msra.mxu0 0
        %2000 = vmatpush.bf16.msra.mxu0 0
        %2001 = vmatpush.bf16.msra.mxu0 %v1992
        %2002 = vmatmul.bf16.gmra.mxu0 %v1980
        %v2003 = vpop.f32.mrf.mxu0
        %v2004 = vadd.f32 0.0, %v2003
        %v2005 = vpop.f32.mrf.mxu0
        %v2006 = vadd.f32 0.0, %v2005
        %2007 = vmatmul.bf16.gmra.mxu0 %v1983
        %v2008 = vpop.f32.mrf.mxu0
        %v2009 = vadd.f32 0.0, %v2008
        %v2010 = vpop.f32.mrf.mxu0
        %v2011 = vadd.f32 0.0, %v2010
        %2012 = vmatmul.bf16.gmra.mxu0 %v1986
        %v2013 = vpop.f32.mrf.mxu0
        %v2014 = vadd.f32 0.0, %v2013
        %v2015 = vpop.f32.mrf.mxu0
        %v2016 = vadd.f32 0.0, %v2015
        %2017 = vmatmul.bf16.gmra.mxu0 %v1989
        %v2018 = vpop.f32.mrf.mxu0
        %v2019 = vadd.f32 0.0, %v2018
        %v2020 = vpop.f32.mrf.mxu0
        %v2021 = vadd.f32 0.0, %v2020
        %2022 = vdwg.mxu0
        %v2023 = vld [vmem:[#allocation3] sm:$0xff]
        %v2024 = vld [vmem:[#allocation3 + $0x8] sm:$0xff]
        %v2025 = vld [vmem:[#allocation3 + $0x10] sm:$0xff]
        %v2026 = vld [vmem:[#allocation3 + $0x18] sm:$0xff]
        %v2027 = vld [vmem:[#allocation3 + $0x20] sm:$0xff]
        %v2028 = vld [vmem:[#allocation3 + $0x28] sm:$0xff]
        %v2029 = vld [vmem:[#allocation3 + $0x30] sm:$0xff]
        %v2030 = vld [vmem:[#allocation3 + $0x38] sm:$0xff]
        %v2031 = vadd.f32 %v2023, %v2004
        %v2032 = vadd.f32 %v2024, %v2006
        %v2033 = vadd.f32 %v2025, %v2009
        %v2034 = vadd.f32 %v2026, %v2011
        %v2035 = vadd.f32 %v2027, %v2014
        %v2036 = vadd.f32 %v2028, %v2016
        %v2037 = vadd.f32 %v2029, %v2019
        %v2038 = vadd.f32 %v2030, %v2021
        %2039 = vst.msk [vmem:[#allocation3] sm:$0xff] %vm272, %v2031
        %2040 = vst.msk [vmem:[#allocation3 + $0x8] sm:$0xff] %vm272, %v2032
        %2041 = vst.msk [vmem:[#allocation3 + $0x10] sm:$0xff] %vm272, %v2033
        %2042 = vst.msk [vmem:[#allocation3 + $0x18] sm:$0xff] %vm272, %v2034
        %2043 = vst.msk [vmem:[#allocation3 + $0x20] sm:$0xff] %vm272, %v2035
        %2044 = vst.msk [vmem:[#allocation3 + $0x28] sm:$0xff] %vm272, %v2036
        %2045 = vst.msk [vmem:[#allocation3 + $0x30] sm:$0xff] %vm272, %v2037
        %2046 = vst.msk [vmem:[#allocation3 + $0x38] sm:$0xff] %vm272, %v2038
        %v2047 = vld [vmem:[#allocation3] sm:$0xff]
        %v2048 = vld [vmem:[#allocation3 + $0x8] sm:$0xff]
        %v2049 = vld [vmem:[#allocation3 + $0x10] sm:$0xff]
        %v2050 = vld [vmem:[#allocation3 + $0x18] sm:$0xff]
        %v2051 = vld [vmem:[#allocation3 + $0x20] sm:$0xff]
        %v2052 = vld [vmem:[#allocation3 + $0x28] sm:$0xff]
        %v2053 = vld [vmem:[#allocation3 + $0x30] sm:$0xff]
        %v2054 = vld [vmem:[#allocation3 + $0x38] sm:$0xff]
        %v2055 = vsel %vm272, %v2047, 0.0
        %v2056 = vsel %vm272, %v2048, 0.0
        %v2057 = vadd.f32 %v2055, %v2056
        %v2058 = vsel %vm272, %v2049, 0.0
        %v2059 = vadd.f32 %v2057, %v2058
        %v2060 = vsel %vm272, %v2050, 0.0
        %v2061 = vadd.f32 %v2059, %v2060
        %v2062 = vsel %vm272, %v2051, 0.0
        %v2063 = vadd.f32 %v2061, %v2062
        %v2064 = vsel %vm272, %v2052, 0.0
        %v2065 = vadd.f32 %v2063, %v2064
        %v2066 = vsel %vm272, %v2053, 0.0
        %v2067 = vadd.f32 %v2065, %v2066
        %v2068 = vsel %vm272, %v2054, 0.0
        %v2069 = vadd.f32 %v2067, %v2068
        %v2070 = vrot.slane %v2069, 4
        %v2071 = vadd.f32 %v2069, %v2070
        %v2072 = vrot.slane %v2071, 2
        %v2073 = vadd.f32 %v2071, %v2072
        %v2074 = vrot.slane %v2073, 1
        %v2075 = vadd.f32 %v2073, %v2074
        %v2076 = vmul.f32 %v2075, %v1133
        %v2077 = vmul.f32 %v2047, %v2047
        %v2078 = vmul.f32 %v2048, %v2048
        %v2079 = vmul.f32 %v2049, %v2049
        %v2080 = vmul.f32 %v2050, %v2050
        %v2081 = vmul.f32 %v2051, %v2051
        %v2082 = vmul.f32 %v2052, %v2052
        %v2083 = vmul.f32 %v2053, %v2053
        %v2084 = vmul.f32 %v2054, %v2054
        %v2085 = vsel %vm272, %v2077, 0.0
        %v2086 = vsel %vm272, %v2078, 0.0
        %v2087 = vadd.f32 %v2085, %v2086
        %v2088 = vsel %vm272, %v2079, 0.0
        %v2089 = vadd.f32 %v2087, %v2088
        %v2090 = vsel %vm272, %v2080, 0.0
        %v2091 = vadd.f32 %v2089, %v2090
        %v2092 = vsel %vm272, %v2081, 0.0
        %v2093 = vadd.f32 %v2091, %v2092
        %v2094 = vsel %vm272, %v2082, 0.0
        %v2095 = vadd.f32 %v2093, %v2094
        %v2096 = vsel %vm272, %v2083, 0.0
        %v2097 = vadd.f32 %v2095, %v2096
        %v2098 = vsel %vm272, %v2084, 0.0
        %v2099 = vadd.f32 %v2097, %v2098
        %v2100 = vrot.slane %v2099, 4
        %v2101 = vadd.f32 %v2099, %v2100
        %v2102 = vrot.slane %v2101, 2
        %v2103 = vadd.f32 %v2101, %v2102
        %v2104 = vrot.slane %v2103, 1
        %v2105 = vadd.f32 %v2103, %v2104
        %v2106 = vmul.f32 %v2105, %v1133
        %v2107 = vmul.f32 %v2076, %v2076
        %v2108 = vsub.f32 %v2106, %v2107
        %v2109 = vmax.f32 %v2108, 0.0
        %v2110 = vsub.f32 %v2047, %v2076
        %v2111 = vsub.f32 %v2048, %v2076
        %v2112 = vsub.f32 %v2049, %v2076
        %v2113 = vsub.f32 %v2050, %v2076
        %v2114 = vsub.f32 %v2051, %v2076
        %v2115 = vsub.f32 %v2052, %v2076
        %v2116 = vsub.f32 %v2053, %v2076
        %v2117 = vsub.f32 %v2054, %v2076
        %v2118 = vadd.f32 %v2109, 1e-05
        %v2119 = vrsqrt.pop %v2118
        %v2120 = vmul.f32 %v2119, %v2118
        %v2121 = vmul.f32 %v2120, %v2119
        %v2122 = vmul.f32 0.5, %v2121
        %v2123 = vsub.f32 1.5, %v2122
        %v2124 = vmul.f32 %v2119, %v2123
        %vm2125 = vweird.f32 %v2118
        %vm2126 = vweird.f32 %v2119
        %vm2127 = vmor %vm2125, %vm2126
        %v2128 = vsel %vm2127, %v2119, %v2124
        %v2129 = vmul.f32 %v2110, %v2128
        %v2130 = vmul.f32 %v2111, %v2128
        %v2131 = vmul.f32 %v2112, %v2128
        %v2132 = vmul.f32 %v2113, %v2128
        %v2133 = vmul.f32 %v2114, %v2128
        %v2134 = vmul.f32 %v2115, %v2128
        %v2135 = vmul.f32 %v2116, %v2128
        %v2136 = vmul.f32 %v2117, %v2128
        %v2137 = vadd.f32 %v2129, %v1187
        %v2138 = vadd.f32 %v2130, %v1188
        %v2139 = vadd.f32 %v2131, %v1189
        %v2140 = vadd.f32 %v2132, %v1190
        %v2141 = vadd.f32 %v2133, %v1191
        %v2142 = vadd.f32 %v2134, %v1192
        %v2143 = vadd.f32 %v2135, %v1193
        %v2144 = vadd.f32 %v2136, %v1194
        %v2145 = vmax.f32 %v2137, 0.0
        %v2146 = vmax.f32 %v2138, 0.0
        %v2147 = vmax.f32 %v2139, 0.0
        %v2148 = vmax.f32 %v2140, 0.0
        %v2149 = vmax.f32 %v2141, 0.0
        %v2150 = vmax.f32 %v2142, 0.0
        %v2151 = vmax.f32 %v2143, 0.0
        %v2152 = vmax.f32 %v2144, 0.0
        %v2153 = vlaneseq
        %v2154 = vshrl.u32 %v2153, 7
        %v2155 = vlaneseq
        %v2156 = vand.u32 %v2155, 127
        %vm2157 = vcmp.eq.s32.totalorder %v2154, %v2156
        %v2158 = vsel %vm2157, 1, 0
        %v2159 = vcvt.s32.f32 %v2158
        %v2161 = vsel %vm272, %v2159, 0
        %v2164 = vsel %vm272, %v2145, 0
        %v2167 = vsel %vm272, %v2146, 0
        %v2170 = vsel %vm272, %v2147, 0
        %v2173 = vsel %vm272, %v2148, 0
        %v2176 = vsel %vm272, %v2149, 0
        %v2179 = vsel %vm272, %v2150, 0
        %v2182 = vsel %vm272, %v2151, 0
        %v2185 = vsel %vm272, %v2152, 0
        %2187 = vmatpush.xpose.msra.mxu0 0.0
        %2188 = vmatpush.xpose.msra.mxu0 0.0
        %2189 = vmatpush.xpose.msra.mxu0 0.0
        %2190 = vmatpush.xpose.msra.mxu0 0.0
        %2191 = vmatpush.xpose.msra.mxu0 0.0
        %2192 = vmatpush.xpose.msra.mxu0 0.0
        %2193 = vmatpush.xpose.msra.mxu0 0.0
        %2194 = vmatpush.xpose.msra.mxu0 0.0
        %2195 = vmatpush.xpose.msra.mxu0 %v2185
        %2196 = vmatpush.xpose.msra.mxu0 %v2182
        %2197 = vmatpush.xpose.msra.mxu0 %v2179
        %2198 = vmatpush.xpose.msra.mxu0 %v2176
        %2199 = vmatpush.xpose.msra.mxu0 %v2173
        %2200 = vmatpush.xpose.msra.mxu0 %v2170
        %2201 = vmatpush.xpose.msra.mxu0 %v2167
        %2202 = vmatpush.xpose.msra.mxu0 %v2164
        %2203 = vmatmul.f32.gmra.mxu0 %v2161
        %v2204 = vpop.f32.mrf.mxu0
        %v2205 = vadd.f32 0.0, %v2204
        %2206 = vdwg.mxu0
        %vm2207 = vcmask 523264
        %v2208 = vsel %vm2207, %v2205, 0.0
        %2209 = vst [vmem:[%s190] sm:$0xff] %v2208
        %s2210 = sand.u32 %s115, 1
        %s2211 = scalar_lea.sflag [#allocation5], %s2210
        %s2212 = sand.u32 %s115, 1
        %s2213 = smul.addr %s2212, 8
        %s2214 = scalar_lea.vmem [#allocation4], %s2213
        // Predicated region
        $region37: #{tpu_custom_call.1} parent=35 // pred_check
          %p2215 = pneg %p125
        $region38: #{tpu_custom_call.1} parent=35 // pred_check_branch
          %2217 = sbr.rel (%p2215) target = $region40
        $region39: #{tpu_custom_call.1} parent=35 // pred_region
          %2219 = vsyncadd %s2211, 0
          %s2220 = smul.addr %s18, 8
          %s2221 = scalar_lea.hbm %s4, %s2220
          %s2223 = sshll.u32 %s2214, 4
          %s2224 = int_to_ptr.vmem [resolvable:$true] %s2223
          %s2225 = sshll.u32 %s2221, 4
          %s2226 = int_to_ptr.hbm [resolvable:$true] %s2225
          %2228 = dma.vmem_to_hbm [thread:$0]  %s2224, 128, %s2226, %s2211
        $region40: #{tpu_custom_call.1} parent=35 // pred_fallthru
          _
      $region36: #{tpu_custom_call.1} parent=5 // pred_fallthru
        _
      %p2229 = scmp.le.s32.totalorder 2, %s13
      // Predicated region
      $region41: #{tpu_custom_call.1} parent=5 // pred_check
        %p2230 = pneg %p2229
      $region42: #{tpu_custom_call.1} parent=5 // pred_check_branch
        %2232 = sbr.rel (%p2230) target = $region44
      $region43: #{tpu_custom_call.1} parent=5 // pred_region
        %s2233 = ssub.s32 %s13, 2
        // Predicated region
        $region45: #{tpu_custom_call.1} parent=43 // pred_check
          %p2234 = pneg %p131
        $region46: #{tpu_custom_call.1} parent=43 // pred_check_branch
          %2236 = sbr.rel (%p2234) target = $region48
        $region47: #{tpu_custom_call.1} parent=43 // pred_region
          %s2237 = sand.u32 %s116, 1
          %s2238 = scalar_lea.sflag [#allocation5], %s2237
          %s2239 = sand.u32 %s116, 1
          %s2240 = smul.addr %s2239, 8
          %s2241 = scalar_lea.vmem [#allocation4], %s2240
          %2243 = dma.done %s2238, 128
        $region48: #{tpu_custom_call.1} parent=43 // pred_fallthru
          _
      $region44: #{tpu_custom_call.1} parent=5 // pred_fallthru
        _
    $region6: #{tpu_custom_call.1} parent=1 // loop_footer
      %s17 = sadd.s32 1, %s13
    $region7: #{tpu_custom_call.1} parent=1 // loop_footer_branch
      %12 = sbr.rel target = $region3
    $region8: #{tpu_custom_call.1} parent=1 // loop_exit
      _
    %2244 = vsyncpa [#allocation5], 1
    %s2245 = scalar_lea.sflag [#allocation5], 1
    %2246 = vsyncpa %s2245, 1

</llo_original>
